<compile_context>
chip_gen: v7x
topology: tpu7x:2x2x1
jax: 0.10.0
libtpu: 0.0.40
codegen_flags: <defaults>
</compile_context>

<pallas_src>
import functools

import jax
import jax.numpy as jnp
from jax.experimental import pallas as pl
from jax.experimental.pallas import tpu as pltpu


# ----------------------------- tiling helpers ------------------------------

def _round_up(x, m):
    return (x + m - 1) // m * m


def _tile(n, max_t, align):
    """Pick (tile, padded_extent): tile <= max_t, multiple of `align`, and
    tile divides padded_extent.  max_t must be a multiple of align."""
    npad = _round_up(max(n, align), align)
    if npad <= max_t:
        return npad, npad
    t = max_t
    while t >= align:
        if npad % t == 0:
            return t, npad
        t -= align
    return max_t, _round_up(n, max_t)   # unreachable in practice


# ----------------------------- Pallas kernels ------------------------------

def _mm_kernel(a_ref, w_ref, b_ref, *rest, relu, has_res):
    """Tiled matmul, K-accumulation directly into the resident output block,
    fused bias + optional residual + optional ReLU epilogue."""
    if has_res:
        r_ref, o_ref = rest
    else:
        (o_ref,) = rest

    k = pl.program_id(2)

    @pl.when(k == 0)
    def _():
        o_ref[...] = jnp.zeros_like(o_ref)

    o_ref[...] += jnp.dot(a_ref[...], w_ref[...],
                          preferred_element_type=jnp.float32)

    @pl.when(k == pl.num_programs(2) - 1)
    def _():
        y = o_ref[...] + b_ref[...]
        if has_res:
            y = y + r_ref[...]
        if relu:
            y = jnp.maximum(y, 0.0)
        o_ref[...] = y


def _max3_kernel(a_ref, b_ref, c_ref, o_ref):
    o_ref[...] = jnp.maximum(jnp.maximum(a_ref[...], b_ref[...]), c_ref[...])


def _gmax_kernel(x_ref, o_ref):
    """Running max over the spatial axis; (B, C) output stays resident."""
    @pl.when(pl.program_id(0) == 0)
    def _():
        o_ref[...] = jnp.full_like(o_ref, -jnp.inf)
    o_ref[...] = jnp.maximum(o_ref[...], jnp.max(x_ref[...], axis=1))


# ----------------------------- Pallas wrappers -----------------------------

@functools.partial(jax.jit, static_argnames=("relu",))
def matmul_bias(a, w, b, res=None, relu=False):
    """y = a @ w + b (+ res) (+ ReLU).  a:(M,K) w:(K,N) b:(N,) res:(M,N)."""
    M, K = a.shape
    _, N = w.shape
    tm, Mp = _tile(M, 512, 16)     # sublane dim, bf16-pack friendly
    tn, Np = _tile(N, 256, 128)    # lane dim
    tk, Kp = _tile(K, 512, 128)    # reduction dim (adaptive, minimal padding)

    ap = jnp.pad(a, ((0, Mp - M), (0, Kp - K))).astype(jnp.bfloat16)
    wp = jnp.pad(w, ((0, Kp - K), (0, Np - N))).astype(jnp.bfloat16)
    bp = jnp.pad(b.reshape(1, -1), ((0, 0), (0, Np - N))).astype(jnp.float32)

    in_arrays = [ap, wp, bp]
    in_specs = [
        pl.BlockSpec((tm, tk), lambda i, j, k: (i, k)),
        pl.BlockSpec((tk, tn), lambda i, j, k: (k, j)),
        pl.BlockSpec((1, tn), lambda i, j, k: (0, j)),
    ]
    has_res = res is not None
    if has_res:
        rp = jnp.pad(res, ((0, Mp - M), (0, Np - N))).astype(jnp.float32)
        in_arrays.append(rp)
        in_specs.append(pl.BlockSpec((tm, tn), lambda i, j, k: (i, j)))

    cost = pl.CostEstimate(
        flops=2 * Mp * Np * Kp,
        transcendentals=0,
        bytes_accessed=(Mp * Kp * 2 + Kp * Np * 2 + Mp * Np * 4
                        + (Mp * Np * 4 if has_res else 0) + Np * 4))

    out = pl.pallas_call(
        functools.partial(_mm_kernel, relu=relu, has_res=has_res),
        out_shape=jax.ShapeDtypeStruct((Mp, Np), jnp.float32),
        grid_spec=pltpu.PrefetchScalarGridSpec(
            num_scalar_prefetch=0,
            grid=(Mp // tm, Np // tn, Kp // tk),
            in_specs=in_specs,
            out_specs=pl.BlockSpec((tm, tn), lambda i, j, k: (i, j)),
        ),
        compiler_params=pltpu.CompilerParams(
            dimension_semantics=("parallel", "parallel", "arbitrary")),
        cost_estimate=cost,
    )(*in_arrays)
    return out[:M, :N]


@jax.jit
def max3(a, b, c):
    """Elementwise max of three same-shape arrays via a tiled, lane-dense
    (128-wide) Pallas kernel."""
    shape = a.shape
    n = a.size
    lane = 128
    rows = pl.cdiv(n, lane)
    tr, rows_p = _tile(rows, 512, 8)
    total = rows_p * lane

    def prep(t):
        t = t.reshape(-1)
        t = jnp.pad(t, (0, total - n), constant_values=-jnp.inf)
        return t.reshape(rows_p, lane)

    out = pl.pallas_call(
        _max3_kernel,
        out_shape=jax.ShapeDtypeStruct((rows_p, lane), a.dtype),
        grid_spec=pltpu.PrefetchScalarGridSpec(
            num_scalar_prefetch=0,
            grid=(rows_p // tr,),
            in_specs=[pl.BlockSpec((tr, lane), lambda i: (i, 0))] * 3,
            out_specs=pl.BlockSpec((tr, lane), lambda i: (i, 0)),
        ),
        compiler_params=pltpu.CompilerParams(
            dimension_semantics=("parallel",)),
    )(prep(a), prep(b), prep(c))
    return out.reshape(-1)[:n].reshape(shape)


@jax.jit
def global_max_pool(f):
    """AdaptiveMaxPool3d((1,1,1)) over channels-last feature map -> (B, C).
    Keeps (B, S, C) layout (C on lanes) and reduces S with a running max."""
    B, D, H, W, C = f.shape
    S = D * H * W
    x = f.reshape(B, S, C)
    Cp = _round_up(C, 128)
    ts, Sp = _tile(S, 256, 8)
    x = jnp.pad(x, ((0, 0), (0, Sp - S), (0, Cp - C)),
                constant_values=-jnp.inf)
    out = pl.pallas_call(
        _gmax_kernel,
        out_shape=jax.ShapeDtypeStruct((B, Cp), jnp.float32),
        grid_spec=pltpu.PrefetchScalarGridSpec(
            num_scalar_prefetch=0,
            grid=(Sp // ts,),
            in_specs=[pl.BlockSpec((B, ts, Cp), lambda s: (0, s, 0))],
            out_specs=pl.BlockSpec((B, Cp), lambda s: (0, 0)),
        ),
        compiler_params=pltpu.CompilerParams(
            dimension_semantics=("arbitrary",)),
    )(x)
    return out[:, :C]


# ------------------------------- conv glue ---------------------------------

def _out_size(n, k, stride, pad, dil):
    return (n + 2 * pad - dil * (k - 1) - 1) // stride + 1


def _im2col_3d(x, k, stride, pad, dil):
    """x: (B, D, H, W, C) -> patches (B*Do*Ho*Wo, k^3*C), kernel-major order."""
    B, D, H, W, C = x.shape
    Do = _out_size(D, k, stride, pad, dil)
    Ho = _out_size(H, k, stride, pad, dil)
    Wo = _out_size(W, k, stride, pad, dil)
    xp = jnp.pad(x, ((0, 0), (pad, pad), (pad, pad), (pad, pad), (0, 0)))
    cols = []
    for kd in range(k):
        for kh in range(k):
            for kw in range(k):
                sl = xp[:,
                        kd * dil: kd * dil + (Do - 1) * stride + 1: stride,
                        kh * dil: kh * dil + (Ho - 1) * stride + 1: stride,
                        kw * dil: kw * dil + (Wo - 1) * stride + 1: stride,
                        :]
                cols.append(sl)
    patches = jnp.concatenate(cols, axis=-1)
    return patches.reshape(B * Do * Ho * Wo, k * k * k * C), (B, Do, Ho, Wo)


@functools.partial(jax.jit, static_argnames=("k", "stride", "pad", "dil", "relu"))
def conv_bn(x, wmat, bias, res=None, *, k, stride, pad, dil, relu):
    """Conv3d (no bias) + folded BatchNorm3d (+ fused residual add) (+ ReLU)."""
    patches, (B, Do, Ho, Wo) = _im2col_3d(x.astype(jnp.bfloat16),
                                          k, stride, pad, dil)
    y = matmul_bias(patches, wmat, bias, res=res, relu=relu)
    return y.reshape(B, Do, Ho, Wo, -1)


def _pool_axis(x, axis):
    """1-D max pool (kernel=3, stride=2, pad=1, -inf padding) along `axis`."""
    n = x.shape[axis]
    no = _out_size(n, 3, 2, 1, 1)
    pad_cfg = [(0, 0)] * x.ndim
    pad_cfg[axis] = (1, 1)
    xp = jnp.pad(x, pad_cfg, constant_values=-jnp.inf)

    def sl(start):
        idx = [slice(None)] * x.ndim
        idx[axis] = slice(start, start + (no - 1) * 2 + 1, 2)
        return xp[tuple(idx)]

    return max3(sl(0), sl(1), sl(2))


@jax.jit
def maxpool3d(x):
    """MaxPool3d(kernel=3, stride=2, padding=1), separable 1-D pools."""
    y = _pool_axis(x, 1)   # D
    y = _pool_axis(y, 2)   # H
    y = _pool_axis(y, 3)   # W
    return y


# --------------------------- parameter creation -----------------------------

def _conv_w(key, k, cin, cout):
    fan_in = k * k * k * cin
    return jax.random.normal(key, (fan_in, cout), jnp.float32) * jnp.sqrt(2.0 / fan_in)


def _bn_params(key, c):
    k1, k2, k3, k4 = jax.random.split(key, 4)
    gamma = 1.0 + 0.1 * jax.random.normal(k1, (c,), jnp.float32)
    beta = 0.1 * jax.random.normal(k2, (c,), jnp.float32)
    mean = 0.1 * jax.random.normal(k3, (c,), jnp.float32)
    var = 1.0 + 0.1 * jax.random.uniform(k4, (c,), jnp.float32)
    return gamma, beta, mean, var


def _fold_conv_bn(w, bn, eps=1e-5):
    gamma, beta, mean, var = bn
    s = gamma / jnp.sqrt(var + eps)
    return w * s[None, :], beta - mean * s


def init_backbone(key):
    """MedicalNet ResNet-34 (3D, BasicBlock, layers [3,4,6,3], shortcut 'B')."""
    keys = iter(jax.random.split(key, 256))
    p = {}
    # stem: Conv3d(1, 64, k=7, stride=2, pad=3, bias=False) + BN + ReLU
    p["stem"] = _fold_conv_bn(_conv_w(next(keys), 7, 1, 64),
                              _bn_params(next(keys), 64))
    blocks = []
    inplanes = 64
    # (planes, num_blocks, stride, dilation) for layer1..layer4
    for planes, nblocks, stride, dil in [(64, 3, 1, 1), (128, 4, 2, 1),
                                         (256, 6, 1, 2), (512, 3, 1, 4)]:
        for b in range(nblocks):
            st = stride if b == 0 else 1
            blk = {
                "conv1": _fold_conv_bn(_conv_w(next(keys), 3, inplanes, planes),
                                       _bn_params(next(keys), planes)),
                "conv2": _fold_conv_bn(_conv_w(next(keys), 3, planes, planes),
                                       _bn_params(next(keys), planes)),
                "stride": st,
                "dil": dil,
                "down": None,
            }
            if b == 0 and (stride != 1 or inplanes != planes):
                blk["down"] = _fold_conv_bn(_conv_w(next(keys), 1, inplanes, planes),
                                            _bn_params(next(keys), planes))
            blocks.append(blk)
            inplanes = planes
    p["blocks"] = blocks
    return p


def init_params(key, num_channels, num_classes):
    keys = jax.random.split(key, num_channels + 2)
    backbones = [init_backbone(keys[i]) for i in range(num_channels)]
    fan1 = num_channels * 512
    fc1_w = jax.random.normal(keys[num_channels], (fan1, 256), jnp.float32) / jnp.sqrt(fan1)
    fc1_b = jnp.zeros((256,), jnp.float32)
    fc2_w = jax.random.normal(keys[num_channels + 1], (256, num_classes), jnp.float32) / jnp.sqrt(256.0)
    fc2_b = jnp.zeros((num_classes,), jnp.float32)
    return {"backbones": backbones, "fc1": (fc1_w, fc1_b), "fc2": (fc2_w, fc2_b)}


# ------------------------------ forward pass --------------------------------

def backbone_forward(x, p):
    """x: (B, D, H, W, 1) -> features (B, d, h, w, 512)."""
    w, b = p["stem"]
    y = conv_bn(x, w, b, k=7, stride=2, pad=3, dil=1, relu=True)
    y = maxpool3d(y)
    for blk in p["blocks"]:
        w1, b1 = blk["conv1"]
        w2, b2 = blk["conv2"]
        out1 = conv_bn(y, w1, b1, k=3, stride=blk["stride"],
                       pad=blk["dil"], dil=blk["dil"], relu=True)
        if blk["down"] is not None:
            wd, bd = blk["down"]
            res = conv_bn(y, wd, bd, k=1, stride=blk["stride"],
                          pad=0, dil=1, relu=False)
        else:
            res = y
        Bn, Dn, Hn, Wn, Cn = out1.shape          # conv2 keeps spatial shape
        res_flat = res.reshape(Bn * Dn * Hn * Wn, -1)
        # residual add + ReLU fused into the conv2 matmul epilogue
        y = conv_bn(out1, w2, b2, res=res_flat, k=3, stride=1,
                    pad=blk["dil"], dil=blk["dil"], relu=True)
    return y


def forward(x, params):
    """x: (B, num_channels, D, H, W) -> logits (B, num_classes)."""
    feats = []
    for i, bp in enumerate(params["backbones"]):
        xi = x[:, i][..., None]                 # (B, D, H, W, 1), per-modality
        feats.append(backbone_forward(xi, bp))  # (B, d, h, w, 512)
    combined = jnp.concatenate(feats, axis=-1)  # channel concat (== torch dim=1)
    pooled = global_max_pool(combined)          # (B, num_channels*512)
    w1, b1 = params["fc1"]
    w2, b2 = params["fc2"]
    h = matmul_bias(pooled, w1, b1, relu=True)
    logits = matmul_bias(h, w2, b2, relu=False)
    return logits


# ---------------------------------- main ------------------------------------

if __name__ == "__main__":
    B, num_channels, num_classes = 2, 2, 3
    D = H = W = 16

    key = jax.random.PRNGKey(0)
    kp, kx = jax.random.split(key)
    params = init_params(kp, num_channels, num_classes)
    x = jax.random.normal(kx, (B, num_channels, D, H, W), jnp.float32)

    logits = forward(x, params)
    logits = jax.block_until_ready(logits)

    assert logits.shape == (B, num_classes), logits.shape
    assert bool(jnp.all(jnp.isfinite(logits)))
    print("KERNEL_OK")
</pallas_src>

<mosaic_0001>
module attributes {stable_mosaic.version = 11 : i64} {
  func.func @_mm_kernel(%arg0: i32, %arg1: i32, %arg2: i32, %arg3: memref<512x384xbf16, #tpu.memory_space<vmem>>, %arg4: memref<384x128xbf16, #tpu.memory_space<vmem>>, %arg5: memref<1x128xf32, #tpu.memory_space<vmem>>, %arg6: memref<512x128xf32, #tpu.memory_space<vmem>>) attributes {dimension_semantics = [#tpu.dimension_semantics<parallel>, #tpu.dimension_semantics<parallel>, #tpu.dimension_semantics<arbitrary>], iteration_bounds = array<i64: 2, 1, 1>, scalar_prefetch = 0 : i64, scratch_operands = 0 : i64, tpu.core_type = #tpu.core_type<tc>, window_params = [{transform_indices = @transform_0, window_bounds = array<i64: 512, 384>}, {transform_indices = @transform_1, window_bounds = array<i64: 384, 128>}, {transform_indices = @transform_2, window_bounds = array<i64: 1, 128>}, {transform_indices = @transform_3, window_bounds = array<i64: 512, 128>}]} {
    %c0_i32 = arith.constant 0 : i32
    %0 = arith.cmpi eq, %arg2, %c0_i32 : i32
    %1 = arith.extui %0 : i1 to i32
    %c0_i32_0 = arith.constant 0 : i32
    %2 = arith.cmpi ne, %1, %c0_i32_0 : i32
    scf.if %2 {
      %cst_10 = arith.constant 0.000000e+00 : f32
      %12 = vector.broadcast %cst_10 : f32 to vector<512x128xf32>
      %c0_11 = arith.constant 0 : index
      %c0_12 = arith.constant 0 : index
      %13 = vector.load %arg6[%c0_11, %c0_12] : memref<512x128xf32, #tpu.memory_space<vmem>>, vector<512x128xf32>
      tpu.vector_store %arg6[%c0_11, %c0_12], %12 {strides = array<i32>} : memref<512x128xf32, #tpu.memory_space<vmem>>, vector<512x128xf32>,
    } else {
    }
    %c0 = arith.constant 0 : index
    %c0_1 = arith.constant 0 : index
    %3 = vector.load %arg6[%c0, %c0_1] : memref<512x128xf32, #tpu.memory_space<vmem>>, vector<512x128xf32>
    %c0_2 = arith.constant 0 : index
    %c0_3 = arith.constant 0 : index
    %4 = vector.load %arg3[%c0_2, %c0_3] : memref<512x384xbf16, #tpu.memory_space<vmem>>, vector<512x384xbf16>
    %c0_4 = arith.constant 0 : index
    %c0_5 = arith.constant 0 : index
    %5 = vector.load %arg4[%c0_4, %c0_5] : memref<384x128xbf16, #tpu.memory_space<vmem>>, vector<384x128xbf16>
    %cst = arith.constant dense<0.000000e+00> : vector<512x128xf32>
    %6 = tpu.matmul %4, %5, %cst {dimension_numbers = #tpu.dot_dimension_numbers<[1], [0], [0], [1], [0, 0, 1, 1], [], []>} : vector<512x384xbf16>, vector<384x128xbf16>, vector<512x128xf32> -> vector<512x128xf32>
    %7 = arith.addf %3, %6 : vector<512x128xf32>
    %c0_6 = arith.constant 0 : index
    %c0_7 = arith.constant 0 : index
    %8 = vector.load %arg6[%c0_6, %c0_7] : memref<512x128xf32, #tpu.memory_space<vmem>>, vector<512x128xf32>
    tpu.vector_store %arg6[%c0_6, %c0_7], %7 {strides = array<i32>} : memref<512x128xf32, #tpu.memory_space<vmem>>, vector<512x128xf32>,
    %c0_i32_8 = arith.constant 0 : i32
    %9 = arith.cmpi eq, %arg2, %c0_i32_8 : i32
    %10 = arith.extui %9 : i1 to i32
    %c0_i32_9 = arith.constant 0 : i32
    %11 = arith.cmpi ne, %10, %c0_i32_9 : i32
    scf.if %11 {
      %c0_10 = arith.constant 0 : index
      %c0_11 = arith.constant 0 : index
      %12 = vector.load %arg6[%c0_10, %c0_11] : memref<512x128xf32, #tpu.memory_space<vmem>>, vector<512x128xf32>
      %c0_12 = arith.constant 0 : index
      %c0_13 = arith.constant 0 : index
      %13 = vector.load %arg5[%c0_12, %c0_13] : memref<1x128xf32, #tpu.memory_space<vmem>>, vector<1x128xf32>
      %14 = vector.broadcast %13 : vector<1x128xf32> to vector<512x128xf32>
      %15 = arith.addf %12, %14 : vector<512x128xf32>
      %cst_14 = arith.constant 0.000000e+00 : f32
      %16 = vector.broadcast %cst_14 : f32 to vector<512x128xf32>
      %17 = arith.maximumf %15, %16 : vector<512x128xf32>
      %c0_15 = arith.constant 0 : index
      %c0_16 = arith.constant 0 : index
      %18 = vector.load %arg6[%c0_15, %c0_16] : memref<512x128xf32, #tpu.memory_space<vmem>>, vector<512x128xf32>
      tpu.vector_store %arg6[%c0_15, %c0_16], %17 {strides = array<i32>} : memref<512x128xf32, #tpu.memory_space<vmem>>, vector<512x128xf32>,
    } else {
    }
    return
  }
  func.func @transform_0(%arg0: i32, %arg1: i32, %arg2: i32) -> (i32, i32) {
    %c0_i32 = arith.constant 0 : i32
    return %arg0, %arg2 : i32, i32
  }
  func.func @transform_1(%arg0: i32, %arg1: i32, %arg2: i32) -> (i32, i32) {
    %c0_i32 = arith.constant 0 : i32
    return %arg2, %arg1 : i32, i32
  }
  func.func @transform_2(%arg0: i32, %arg1: i32, %arg2: i32) -> (i32, i32) {
    %c0_i32 = arith.constant 0 : i32
    %c0_i32_0 = arith.constant 0 : i32
    return %c0_i32, %arg1 : i32, i32
  }
  func.func @transform_3(%arg0: i32, %arg1: i32, %arg2: i32) -> (i32, i32) {
    %c0_i32 = arith.constant 0 : i32
    return %arg0, %arg1 : i32, i32
  }
}

</mosaic_0001>

<llo_original>
// kernel: matmul_bias.1
$region0: #{matmul_bias.1}
  #allocation0 [shape = 'u32[]', space=smem, size = 0x4, offset = 0x4, fixed_abs, tag = 'smem constant byte address 0x4 - core index']
  #allocation1 [shape = 'u32[144,128]{1,0:T(1,128)}', space=vmem, size = 0x12000, scoped, tag = 'internal scratch']
  %s0 = inlined_call_operand.vmem [shape: bf16[1024,384], index: 0, kind: input, shape index: {}]
  %s1 = inlined_call_operand.vmem [shape: bf16[384,128], index: 1, kind: input, shape index: {}]
  %s2 = inlined_call_operand.vmem [shape: f32[1,128], index: 2, kind: input, shape index: {}]
  %s3 = inlined_call_operand.vmem [shape: f32[1024,128], index: 3, kind: output, shape index: {}]
  %s4 = sld [smem:[#allocation0]]
  $region53: #{matmul_bias.1} parent=0
    _
  %s6 = ssub.s32 1, %s4
  %s7 = scalar_select 0, %s6, %s4
  loop: start=0, step=1, limit=4
  $region2: #{matmul_bias.1} parent=0 // loop_pre_header
    _
  $region3: #{matmul_bias.1} parent=0 // loop_header
    %s9 = sphi 0, %s13
    %p10 = scmp.ge.s32.totalorder %s9, 4
    %s16 = sphi 0, %s35
    %s17 = sphi 0, %s31
    %s18 = sphi 0, %s27
    %s19 = sphi 0, %s16
    %s20 = sphi 0, %s17
    %s21 = sphi 0, %s18
    %s22 = sphi 0, %s19
    %s23 = sphi 0, %s20
    %s24 = sphi 0, %s21
    %s40 = sphi 0, %s42
    %s43 = sphi 0, %s40
    %s44 = sphi 0, %s43
    %s60 = sphi 0, %s44
    %s68 = sphi 0, %s70
    %s71 = sphi 0, %s68
    %s72 = sphi 0, %s71
    %s88 = sphi 0, %s72
    %s94 = sphi 0, %s96
    %s97 = sphi 0, %s94
    %s98 = sphi 0, %s97
    %s114 = sphi 0, %s98
    %s122 = sphi 0, %s124
    %s125 = sphi 0, %s122
    %s126 = sphi 0, %s125
    %s142 = sphi 0, %s126
  $region4: #{matmul_bias.1} parent=0 // loop_header_branch
    %12 = sbr.rel (%p10) target = $region8
  $region5: #{matmul_bias.1} parent=0 // loop_body
    %s14 = ssub.s32 %s9, 1
    %s15 = ssub.s32 %s9, 2
    %s25 = sadd.s32 1, %s18
    %p26 = scmp.ge.s32.totalorder %s25, 1
    %s27 = scalar_select %p26, 0, %s25
    %s28 = sadd.s32 1, %s17
    %s29 = scalar_select %p26, %s28, %s17
    %p30 = scmp.ge.s32.totalorder %s29, 1
    %s31 = scalar_select %p30, 0, %s29
    %s32 = sadd.s32 1, %s16
    %s33 = scalar_select %p30, %s32, %s16
    %p34 = scmp.ge.s32.totalorder %s33, 2
    %s35 = scalar_select %p34, 0, %s33
    %s36 = ssub.s32 %s16, %s35
    %s37 = ssub.s32 %s18, %s27
    %s38 = sor.u32 %s36, %s37
    %p39 = scmp.eq.s32.totalorder %s38, 0
    %s41 = sadd.s32 %s40, 1
    %s42 = scalar_select %p39, %s40, %s41
    %p45 = pneg %p39
    %p46 = scmp.eq.s32.totalorder %s9, 1
    %p47 = por %p45, %p46
    %p48 = scmp.ne.s32.totalorder %s40, %s43
    %p49 = scmp.eq.s32.totalorder %s9, 0
    %p50 = por %p48, %p49
    %p51 = scmp.ne.s32.totalorder %s40, %s43
    %p52 = scmp.eq.s32.totalorder %s14, 1
    %p53 = por %p51, %p52
    %p54 = scmp.ne.s32.totalorder %s43, %s44
    %p55 = scmp.eq.s32.totalorder %s14, 0
    %p56 = por %p54, %p55
    %p57 = scmp.ne.s32.totalorder %s43, %s44
    %p58 = scmp.eq.s32.totalorder %s15, 1
    %p59 = por %p57, %p58
    %p61 = scmp.ne.s32.totalorder %s44, %s60
    %p62 = scmp.eq.s32.totalorder %s15, 0
    %p63 = por %p61, %p62
    %s64 = ssub.s32 %s18, %s27
    %s65 = ssub.s32 %s17, %s31
    %s66 = sor.u32 %s64, %s65
    %p67 = scmp.eq.s32.totalorder %s66, 0
    %s69 = sadd.s32 %s68, 1
    %s70 = scalar_select %p67, %s68, %s69
    %p73 = pneg %p67
    %p74 = scmp.eq.s32.totalorder %s9, 1
    %p75 = por %p73, %p74
    %p76 = scmp.ne.s32.totalorder %s68, %s71
    %p77 = scmp.eq.s32.totalorder %s9, 0
    %p78 = por %p76, %p77
    %p79 = scmp.ne.s32.totalorder %s68, %s71
    %p80 = scmp.eq.s32.totalorder %s14, 1
    %p81 = por %p79, %p80
    %p82 = scmp.ne.s32.totalorder %s71, %s72
    %p83 = scmp.eq.s32.totalorder %s14, 0
    %p84 = por %p82, %p83
    %p85 = scmp.ne.s32.totalorder %s71, %s72
    %p86 = scmp.eq.s32.totalorder %s15, 1
    %p87 = por %p85, %p86
    %p89 = scmp.ne.s32.totalorder %s72, %s88
    %p90 = scmp.eq.s32.totalorder %s15, 0
    %p91 = por %p89, %p90
    %s92 = ssub.s32 %s17, %s31
    %p93 = scmp.eq.s32.totalorder %s92, 0
    %s95 = sadd.s32 %s94, 1
    %s96 = scalar_select %p93, %s94, %s95
    %p99 = pneg %p93
    %p100 = scmp.eq.s32.totalorder %s9, 1
    %p101 = por %p99, %p100
    %p102 = scmp.ne.s32.totalorder %s94, %s97
    %p103 = scmp.eq.s32.totalorder %s9, 0
    %p104 = por %p102, %p103
    %p105 = scmp.ne.s32.totalorder %s94, %s97
    %p106 = scmp.eq.s32.totalorder %s14, 1
    %p107 = por %p105, %p106
    %p108 = scmp.ne.s32.totalorder %s97, %s98
    %p109 = scmp.eq.s32.totalorder %s14, 0
    %p110 = por %p108, %p109
    %p111 = scmp.ne.s32.totalorder %s97, %s98
    %p112 = scmp.eq.s32.totalorder %s15, 1
    %p113 = por %p111, %p112
    %p115 = scmp.ne.s32.totalorder %s98, %s114
    %p116 = scmp.eq.s32.totalorder %s15, 0
    %p117 = por %p115, %p116
    %s118 = ssub.s32 %s16, %s35
    %s119 = ssub.s32 %s17, %s31
    %s120 = sor.u32 %s118, %s119
    %p121 = scmp.eq.s32.totalorder %s120, 0
    %s123 = sadd.s32 %s122, 1
    %s124 = scalar_select %p121, %s122, %s123
    %p127 = pneg %p121
    %p128 = scmp.eq.s32.totalorder %s9, 1
    %p129 = por %p127, %p128
    %p130 = scmp.ne.s32.totalorder %s122, %s125
    %p131 = scmp.eq.s32.totalorder %s9, 0
    %p132 = por %p130, %p131
    %p133 = scmp.ne.s32.totalorder %s122, %s125
    %p134 = scmp.eq.s32.totalorder %s14, 1
    %p135 = por %p133, %p134
    %p136 = scmp.ne.s32.totalorder %s125, %s126
    %p137 = scmp.eq.s32.totalorder %s14, 0
    %p138 = por %p136, %p137
    %p139 = scmp.ne.s32.totalorder %s125, %s126
    %p140 = scmp.eq.s32.totalorder %s15, 1
    %p141 = por %p139, %p140
    %p143 = scmp.ne.s32.totalorder %s126, %s142
    %p144 = scmp.eq.s32.totalorder %s15, 0
    %p145 = por %p143, %p144
    %p146 = scmp.le.s32.totalorder 1, %s9
    %p147 = scmp.lt.s32.totalorder %s9, 3
    %p148 = pnand %p146, %p147
    %p149 = pneg %p148
    // Predicated region
    $region9: #{matmul_bias.1} parent=5 // pred_check
      _
    $region10: #{matmul_bias.1} parent=5 // pred_check_branch
      %151 = sbr.rel (%p148) target = $region12
    $region11: #{matmul_bias.1} parent=5 // pred_region
      %s152 = ssub.s32 %s9, 1
      // Predicated region
      $region13: #{matmul_bias.1} parent=11 // pred_check
        %p153 = pneg %p84
      $region14: #{matmul_bias.1} parent=11 // pred_check_branch
        %155 = sbr.rel (%p153) target = $region16
      $region15: #{matmul_bias.1} parent=11 // pred_region
        %s156 = smul.u32 48, %s21
        %p157 = scmp.lt.s32.totalorder %s156, 47
        %s158 = scalar_select %p157, %s156, 47
        %p159 = scmp.lt.s32.totalorder %s20, 0
        %s160 = scalar_select %p159, %s20, 0
        %s161 = sadd.s32 %s160, %s158
        %s162 = smul.addr %s161, 4
        %s163 = scalar_lea.vmem %s1, %s162
        %s164 = smul.u32 48, %s21
      $region16: #{matmul_bias.1} parent=11 // pred_fallthru
        _
      // Predicated region
      $region17: #{matmul_bias.1} parent=11 // pred_check
        %p165 = pneg %p110
      $region18: #{matmul_bias.1} parent=11 // pred_check_branch
        %167 = sbr.rel (%p165) target = $region20
      $region19: #{matmul_bias.1} parent=11 // pred_region
        %p168 = scmp.lt.s32.totalorder %s20, 0
        %s169 = scalar_select %p168, %s20, 0
        %s170 = scalar_lea.vmem %s2, %s169
      $region20: #{matmul_bias.1} parent=11 // pred_fallthru
        _
    $region12: #{matmul_bias.1} parent=5 // pred_fallthru
      _
    %p171 = scmp.lt.s32.totalorder %s9, 2
    // Predicated region
    $region21: #{matmul_bias.1} parent=5 // pred_check
      %p172 = pneg %p171
    $region22: #{matmul_bias.1} parent=5 // pred_check_branch
      %174 = sbr.rel (%p172) target = $region24
    $region23: #{matmul_bias.1} parent=5 // pred_region
      // Predicated region
      $region25: #{matmul_bias.1} parent=23 // pred_check
        %p175 = pneg %p50
      $region26: #{matmul_bias.1} parent=23 // pred_check_branch
        %177 = sbr.rel (%p175) target = $region28
      $region27: #{matmul_bias.1} parent=23 // pred_region
        %s178 = smul.u32 64, %s16
        %s179 = smul.u32 3, %s18
        %p180 = scmp.lt.s32.totalorder %s178, 127
        %s181 = scalar_select %p180, %s178, 127
        %p182 = scmp.lt.s32.totalorder %s179, 2
        %s183 = scalar_select %p182, %s179, 2
        %s184 = smul.addr %s181, 3
        %s185 = sadd.s32 %s183, %s184
        %s186 = smul.addr %s185, 4
        %s187 = scalar_lea.vmem %s0, %s186
        %s188 = smul.u32 64, %s16
        %s189 = smul.u32 3, %s18
      $region28: #{matmul_bias.1} parent=23 // pred_fallthru
        _
    $region24: #{matmul_bias.1} parent=5 // pred_fallthru
      _
    %p190 = scmp.le.s32.totalorder 1, %s9
    %p191 = scmp.lt.s32.totalorder %s9, 3
    %p192 = pnand %p190, %p191
    %p193 = pneg %p192
    // Predicated region
    $region29: #{matmul_bias.1} parent=5 // pred_check
      _
    $region30: #{matmul_bias.1} parent=5 // pred_check_branch
      %195 = sbr.rel (%p192) target = $region32
    $region31: #{matmul_bias.1} parent=5 // pred_region
      %s196 = ssub.s32 %s9, 1
      %s197 = smul.u32 64, %s19
      %s198 = smul.u32 3, %s21
      %p199 = scmp.lt.s32.totalorder %s197, 127
      %s200 = scalar_select %p199, %s197, 127
      %p201 = scmp.lt.s32.totalorder %s198, 2
      %s202 = scalar_select %p201, %s198, 2
      %s203 = smul.addr %s200, 3
      %s204 = sadd.s32 %s202, %s203
      %s205 = smul.addr %s204, 4
      %s206 = scalar_lea.vmem %s0, %s205
      %p207 = pneg %p56
      %p208 = pneg %p53
      %s209 = smul.u32 48, %s21
      %p210 = scmp.lt.s32.totalorder %s209, 47
      %s211 = scalar_select %p210, %s209, 47
      %p212 = scmp.lt.s32.totalorder %s20, 0
      %s213 = scalar_select %p212, %s20, 0
      %s214 = sadd.s32 %s213, %s211
      %s215 = smul.addr %s214, 4
      %s216 = scalar_lea.vmem %s1, %s215
      %p217 = pneg %p84
      %p218 = pneg %p81
      %p219 = scmp.lt.s32.totalorder %s20, 0
      %s220 = scalar_select %p219, %s20, 0
      %s221 = scalar_lea.vmem %s2, %s220
      %p222 = pneg %p110
      %p223 = pneg %p107
      %p224 = pneg %p138
      %p225 = pneg %p135
      %s226 = smul.u32 64, %s19
      %p227 = scmp.lt.s32.totalorder %s226, 127
      %s228 = scalar_select %p227, %s226, 127
      %p229 = scmp.lt.s32.totalorder %s20, 0
      %s230 = scalar_select %p229, %s20, 0
      %s231 = sadd.s32 %s230, %s228
      %s232 = smul.addr %s231, 8
      %s233 = scalar_lea.vmem %s3, %s232
      %s234 = smul.u32 64, %s19
      %s235 = smul.u32 3, %s21
      %p236 = scmp.lt.s32.totalorder %s234, 127
      %s237 = scalar_select %p236, %s234, 127
      %p238 = scmp.lt.s32.totalorder %s235, 2
      %s239 = scalar_select %p238, %s235, 2
      %s240 = smul.addr %s237, 3
      %s241 = sadd.s32 %s239, %s240
      %s242 = smul.addr %s241, 4
      %s243 = scalar_lea.vmem %s0, %s242
      %s244 = smul.u32 64, %s19
      %s245 = smul.u32 3, %s21
      %s246 = smul.u32 48, %s21
      %p247 = scmp.lt.s32.totalorder %s246, 47
      %s248 = scalar_select %p247, %s246, 47
      %p249 = scmp.lt.s32.totalorder %s20, 0
      %s250 = scalar_select %p249, %s20, 0
      %s251 = sadd.s32 %s250, %s248
      %s252 = smul.addr %s251, 4
      %s253 = scalar_lea.vmem %s1, %s252
      %s254 = smul.u32 48, %s21
      %p255 = scmp.lt.s32.totalorder %s20, 0
      %s256 = scalar_select %p255, %s20, 0
      %s257 = scalar_lea.vmem %s2, %s256
      %s258 = smul.u32 64, %s19
      %p259 = scmp.lt.s32.totalorder %s258, 127
      %s260 = scalar_select %p259, %s258, 127
      %p261 = scmp.lt.s32.totalorder %s20, 0
      %s262 = scalar_select %p261, %s20, 0
      %s263 = sadd.s32 %s262, %s260
      %s264 = smul.addr %s263, 8
      %s265 = scalar_lea.vmem %s3, %s264
      %s266 = smul.u32 64, %s19
      %p268 = scmp.eq.s32.totalorder %s21, 0
      // Predicated region
      $region33: #{matmul_bias.1} parent=31 // pred_check
        %p269 = pneg %p268
      $region34: #{matmul_bias.1} parent=31 // pred_check_branch
        %271 = sbr.rel (%p269) target = $region36
      $region35: #{matmul_bias.1} parent=31 // pred_region
        %272 = vst [vmem:[%s265] sm:$0xff] 0.0
        %273 = vst [vmem:[%s265 + $0x8] sm:$0xff] 0.0
        %274 = vst [vmem:[%s265 + $0x10] sm:$0xff] 0.0
        %275 = vst [vmem:[%s265 + $0x18] sm:$0xff] 0.0
        %276 = vst [vmem:[%s265 + $0x20] sm:$0xff] 0.0
        %277 = vst [vmem:[%s265 + $0x28] sm:$0xff] 0.0
        %278 = vst [vmem:[%s265 + $0x30] sm:$0xff] 0.0
        %279 = vst [vmem:[%s265 + $0x38] sm:$0xff] 0.0
        %280 = vst [vmem:[%s265 + $0x40] sm:$0xff] 0.0
        %281 = vst [vmem:[%s265 + $0x48] sm:$0xff] 0.0
        %282 = vst [vmem:[%s265 + $0x50] sm:$0xff] 0.0
        %283 = vst [vmem:[%s265 + $0x58] sm:$0xff] 0.0
        %284 = vst [vmem:[%s265 + $0x60] sm:$0xff] 0.0
        %285 = vst [vmem:[%s265 + $0x68] sm:$0xff] 0.0
        %286 = vst [vmem:[%s265 + $0x70] sm:$0xff] 0.0
        %287 = vst [vmem:[%s265 + $0x78] sm:$0xff] 0.0
        %288 = vst [vmem:[%s265 + $0x80] sm:$0xff] 0.0
        %289 = vst [vmem:[%s265 + $0x88] sm:$0xff] 0.0
        %290 = vst [vmem:[%s265 + $0x90] sm:$0xff] 0.0
        %291 = vst [vmem:[%s265 + $0x98] sm:$0xff] 0.0
        %292 = vst [vmem:[%s265 + $0xa0] sm:$0xff] 0.0
        %293 = vst [vmem:[%s265 + $0xa8] sm:$0xff] 0.0
        %294 = vst [vmem:[%s265 + $0xb0] sm:$0xff] 0.0
        %295 = vst [vmem:[%s265 + $0xb8] sm:$0xff] 0.0
        %296 = vst [vmem:[%s265 + $0xc0] sm:$0xff] 0.0
        %297 = vst [vmem:[%s265 + $0xc8] sm:$0xff] 0.0
        %298 = vst [vmem:[%s265 + $0xd0] sm:$0xff] 0.0
        %299 = vst [vmem:[%s265 + $0xd8] sm:$0xff] 0.0
        %300 = vst [vmem:[%s265 + $0xe0] sm:$0xff] 0.0
        %301 = vst [vmem:[%s265 + $0xe8] sm:$0xff] 0.0
        %302 = vst [vmem:[%s265 + $0xf0] sm:$0xff] 0.0
        %303 = vst [vmem:[%s265 + $0xf8] sm:$0xff] 0.0
        %304 = vst [vmem:[%s265 + $0x100] sm:$0xff] 0.0
        %305 = vst [vmem:[%s265 + $0x108] sm:$0xff] 0.0
        %306 = vst [vmem:[%s265 + $0x110] sm:$0xff] 0.0
        %307 = vst [vmem:[%s265 + $0x118] sm:$0xff] 0.0
        %308 = vst [vmem:[%s265 + $0x120] sm:$0xff] 0.0
        %309 = vst [vmem:[%s265 + $0x128] sm:$0xff] 0.0
        %310 = vst [vmem:[%s265 + $0x130] sm:$0xff] 0.0
        %311 = vst [vmem:[%s265 + $0x138] sm:$0xff] 0.0
        %312 = vst [vmem:[%s265 + $0x140] sm:$0xff] 0.0
        %313 = vst [vmem:[%s265 + $0x148] sm:$0xff] 0.0
        %314 = vst [vmem:[%s265 + $0x150] sm:$0xff] 0.0
        %315 = vst [vmem:[%s265 + $0x158] sm:$0xff] 0.0
        %316 = vst [vmem:[%s265 + $0x160] sm:$0xff] 0.0
        %317 = vst [vmem:[%s265 + $0x168] sm:$0xff] 0.0
        %318 = vst [vmem:[%s265 + $0x170] sm:$0xff] 0.0
        %319 = vst [vmem:[%s265 + $0x178] sm:$0xff] 0.0
        %320 = vst [vmem:[%s265 + $0x180] sm:$0xff] 0.0
        %321 = vst [vmem:[%s265 + $0x188] sm:$0xff] 0.0
        %322 = vst [vmem:[%s265 + $0x190] sm:$0xff] 0.0
        %323 = vst [vmem:[%s265 + $0x198] sm:$0xff] 0.0
        %324 = vst [vmem:[%s265 + $0x1a0] sm:$0xff] 0.0
        %325 = vst [vmem:[%s265 + $0x1a8] sm:$0xff] 0.0
        %326 = vst [vmem:[%s265 + $0x1b0] sm:$0xff] 0.0
        %327 = vst [vmem:[%s265 + $0x1b8] sm:$0xff] 0.0
        %328 = vst [vmem:[%s265 + $0x1c0] sm:$0xff] 0.0
        %329 = vst [vmem:[%s265 + $0x1c8] sm:$0xff] 0.0
        %330 = vst [vmem:[%s265 + $0x1d0] sm:$0xff] 0.0
        %331 = vst [vmem:[%s265 + $0x1d8] sm:$0xff] 0.0
        %332 = vst [vmem:[%s265 + $0x1e0] sm:$0xff] 0.0
        %333 = vst [vmem:[%s265 + $0x1e8] sm:$0xff] 0.0
        %334 = vst [vmem:[%s265 + $0x1f0] sm:$0xff] 0.0
        %335 = vst [vmem:[%s265 + $0x1f8] sm:$0xff] 0.0
      $region36: #{matmul_bias.1} parent=31 // pred_fallthru
        _
      %v336 = vld [vmem:[%s265] sm:$0xff]
      %v337 = vld [vmem:[%s265 + $0x8] sm:$0xff]
      %v338 = vld [vmem:[%s265 + $0x10] sm:$0xff]
      %v339 = vld [vmem:[%s265 + $0x18] sm:$0xff]
      %v340 = vld [vmem:[%s265 + $0x20] sm:$0xff]
      %v341 = vld [vmem:[%s265 + $0x28] sm:$0xff]
      %v342 = vld [vmem:[%s265 + $0x30] sm:$0xff]
      %v343 = vld [vmem:[%s265 + $0x38] sm:$0xff]
      %v344 = vld [vmem:[%s265 + $0x40] sm:$0xff]
      %v345 = vld [vmem:[%s265 + $0x48] sm:$0xff]
      %v346 = vld [vmem:[%s265 + $0x50] sm:$0xff]
      %v347 = vld [vmem:[%s265 + $0x58] sm:$0xff]
      %v348 = vld [vmem:[%s265 + $0x60] sm:$0xff]
      %v349 = vld [vmem:[%s265 + $0x68] sm:$0xff]
      %v350 = vld [vmem:[%s265 + $0x70] sm:$0xff]
      %v351 = vld [vmem:[%s265 + $0x78] sm:$0xff]
      %v352 = vld [vmem:[%s265 + $0x80] sm:$0xff]
      %v353 = vld [vmem:[%s265 + $0x88] sm:$0xff]
      %v354 = vld [vmem:[%s265 + $0x90] sm:$0xff]
      %v355 = vld [vmem:[%s265 + $0x98] sm:$0xff]
      %v356 = vld [vmem:[%s265 + $0xa0] sm:$0xff]
      %v357 = vld [vmem:[%s265 + $0xa8] sm:$0xff]
      %v358 = vld [vmem:[%s265 + $0xb0] sm:$0xff]
      %v359 = vld [vmem:[%s265 + $0xb8] sm:$0xff]
      %v360 = vld [vmem:[%s265 + $0xc0] sm:$0xff]
      %v361 = vld [vmem:[%s265 + $0xc8] sm:$0xff]
      %v362 = vld [vmem:[%s265 + $0xd0] sm:$0xff]
      %v363 = vld [vmem:[%s265 + $0xd8] sm:$0xff]
      %v364 = vld [vmem:[%s265 + $0xe0] sm:$0xff]
      %v365 = vld [vmem:[%s265 + $0xe8] sm:$0xff]
      %v366 = vld [vmem:[%s265 + $0xf0] sm:$0xff]
      %v367 = vld [vmem:[%s265 + $0xf8] sm:$0xff]
      %v368 = vld [vmem:[%s265 + $0x100] sm:$0xff]
      %v369 = vld [vmem:[%s265 + $0x108] sm:$0xff]
      %v370 = vld [vmem:[%s265 + $0x110] sm:$0xff]
      %v371 = vld [vmem:[%s265 + $0x118] sm:$0xff]
      %v372 = vld [vmem:[%s265 + $0x120] sm:$0xff]
      %v373 = vld [vmem:[%s265 + $0x128] sm:$0xff]
      %v374 = vld [vmem:[%s265 + $0x130] sm:$0xff]
      %v375 = vld [vmem:[%s265 + $0x138] sm:$0xff]
      %v376 = vld [vmem:[%s265 + $0x140] sm:$0xff]
      %v377 = vld [vmem:[%s265 + $0x148] sm:$0xff]
      %v378 = vld [vmem:[%s265 + $0x150] sm:$0xff]
      %v379 = vld [vmem:[%s265 + $0x158] sm:$0xff]
      %v380 = vld [vmem:[%s265 + $0x160] sm:$0xff]
      %v381 = vld [vmem:[%s265 + $0x168] sm:$0xff]
      %v382 = vld [vmem:[%s265 + $0x170] sm:$0xff]
      %v383 = vld [vmem:[%s265 + $0x178] sm:$0xff]
      %v384 = vld [vmem:[%s265 + $0x180] sm:$0xff]
      %v385 = vld [vmem:[%s265 + $0x188] sm:$0xff]
      %v386 = vld [vmem:[%s265 + $0x190] sm:$0xff]
      %v387 = vld [vmem:[%s265 + $0x198] sm:$0xff]
      %v388 = vld [vmem:[%s265 + $0x1a0] sm:$0xff]
      %v389 = vld [vmem:[%s265 + $0x1a8] sm:$0xff]
      %v390 = vld [vmem:[%s265 + $0x1b0] sm:$0xff]
      %v391 = vld [vmem:[%s265 + $0x1b8] sm:$0xff]
      %v392 = vld [vmem:[%s265 + $0x1c0] sm:$0xff]
      %v393 = vld [vmem:[%s265 + $0x1c8] sm:$0xff]
      %v394 = vld [vmem:[%s265 + $0x1d0] sm:$0xff]
      %v395 = vld [vmem:[%s265 + $0x1d8] sm:$0xff]
      %v396 = vld [vmem:[%s265 + $0x1e0] sm:$0xff]
      %v397 = vld [vmem:[%s265 + $0x1e8] sm:$0xff]
      %v398 = vld [vmem:[%s265 + $0x1f0] sm:$0xff]
      %v399 = vld [vmem:[%s265 + $0x1f8] sm:$0xff]
      %v400 = vld [vmem:[%s243] sm:$0xff]
      %v401 = vld [vmem:[%s243 + $0x8] sm:$0xf]
      %v402 = vld [vmem:[%s243 + $0xc] sm:$0xff]
      %v403 = vld [vmem:[%s243 + $0x14] sm:$0xf]
      %v404 = vld [vmem:[%s243 + $0x18] sm:$0xff]
      %v405 = vld [vmem:[%s243 + $0x20] sm:$0xf]
      %v406 = vld [vmem:[%s243 + $0x24] sm:$0xff]
      %v407 = vld [vmem:[%s243 + $0x2c] sm:$0xf]
      %v408 = vld [vmem:[%s243 + $0x30] sm:$0xff]
      %v409 = vld [vmem:[%s243 + $0x38] sm:$0xf]
      %v410 = vld [vmem:[%s243 + $0x3c] sm:$0xff]
      %v411 = vld [vmem:[%s243 + $0x44] sm:$0xf]
      %v412 = vld [vmem:[%s243 + $0x48] sm:$0xff]
      %v413 = vld [vmem:[%s243 + $0x50] sm:$0xf]
      %v414 = vld [vmem:[%s243 + $0x54] sm:$0xff]
      %v415 = vld [vmem:[%s243 + $0x5c] sm:$0xf]
      %v416 = vld [vmem:[%s243 + $0x60] sm:$0xff]
      %v417 = vld [vmem:[%s243 + $0x68] sm:$0xf]
      %v418 = vld [vmem:[%s243 + $0x6c] sm:$0xff]
      %v419 = vld [vmem:[%s243 + $0x74] sm:$0xf]
      %v420 = vld [vmem:[%s243 + $0x78] sm:$0xff]
      %v421 = vld [vmem:[%s243 + $0x80] sm:$0xf]
      %v422 = vld [vmem:[%s243 + $0x84] sm:$0xff]
      %v423 = vld [vmem:[%s243 + $0x8c] sm:$0xf]
      %v424 = vld [vmem:[%s243 + $0x90] sm:$0xff]
      %v425 = vld [vmem:[%s243 + $0x98] sm:$0xf]
      %v426 = vld [vmem:[%s243 + $0x9c] sm:$0xff]
      %v427 = vld [vmem:[%s243 + $0xa4] sm:$0xf]
      %v428 = vld [vmem:[%s243 + $0xa8] sm:$0xff]
      %v429 = vld [vmem:[%s243 + $0xb0] sm:$0xf]
      %v430 = vld [vmem:[%s243 + $0xb4] sm:$0xff]
      %v431 = vld [vmem:[%s243 + $0xbc] sm:$0xf]
      %v432 = vld [vmem:[%s243 + $0xc0] sm:$0xff]
      %v433 = vld [vmem:[%s243 + $0xc8] sm:$0xf]
      %v434 = vld [vmem:[%s243 + $0xcc] sm:$0xff]
      %v435 = vld [vmem:[%s243 + $0xd4] sm:$0xf]
      %v436 = vld [vmem:[%s243 + $0xd8] sm:$0xff]
      %v437 = vld [vmem:[%s243 + $0xe0] sm:$0xf]
      %v438 = vld [vmem:[%s243 + $0xe4] sm:$0xff]
      %v439 = vld [vmem:[%s243 + $0xec] sm:$0xf]
      %v440 = vld [vmem:[%s243 + $0xf0] sm:$0xff]
      %v441 = vld [vmem:[%s243 + $0xf8] sm:$0xf]
      %v442 = vld [vmem:[%s243 + $0xfc] sm:$0xff]
      %v443 = vld [vmem:[%s243 + $0x104] sm:$0xf]
      %v444 = vld [vmem:[%s243 + $0x108] sm:$0xff]
      %v445 = vld [vmem:[%s243 + $0x110] sm:$0xf]
      %v446 = vld [vmem:[%s243 + $0x114] sm:$0xff]
      %v447 = vld [vmem:[%s243 + $0x11c] sm:$0xf]
      %v448 = vld [vmem:[%s243 + $0x120] sm:$0xff]
      %v449 = vld [vmem:[%s243 + $0x128] sm:$0xf]
      %v450 = vld [vmem:[%s243 + $0x12c] sm:$0xff]
      %v451 = vld [vmem:[%s243 + $0x134] sm:$0xf]
      %v452 = vld [vmem:[%s243 + $0x138] sm:$0xff]
      %v453 = vld [vmem:[%s243 + $0x140] sm:$0xf]
      %v454 = vld [vmem:[%s243 + $0x144] sm:$0xff]
      %v455 = vld [vmem:[%s243 + $0x14c] sm:$0xf]
      %v456 = vld [vmem:[%s243 + $0x150] sm:$0xff]
      %v457 = vld [vmem:[%s243 + $0x158] sm:$0xf]
      %v458 = vld [vmem:[%s243 + $0x15c] sm:$0xff]
      %v459 = vld [vmem:[%s243 + $0x164] sm:$0xf]
      %v460 = vld [vmem:[%s243 + $0x168] sm:$0xff]
      %v461 = vld [vmem:[%s243 + $0x170] sm:$0xf]
      %v462 = vld [vmem:[%s243 + $0x174] sm:$0xff]
      %v463 = vld [vmem:[%s243 + $0x17c] sm:$0xf]
      %v464 = vld [vmem:[%s243 + $0x180] sm:$0xff]
      %v465 = vld [vmem:[%s243 + $0x188] sm:$0xf]
      %v466 = vld [vmem:[%s243 + $0x18c] sm:$0xff]
      %v467 = vld [vmem:[%s243 + $0x194] sm:$0xf]
      %v468 = vld [vmem:[%s243 + $0x198] sm:$0xff]
      %v469 = vld [vmem:[%s243 + $0x1a0] sm:$0xf]
      %v470 = vld [vmem:[%s243 + $0x1a4] sm:$0xff]
      %v471 = vld [vmem:[%s243 + $0x1ac] sm:$0xf]
      %v472 = vld [vmem:[%s243 + $0x1b0] sm:$0xff]
      %v473 = vld [vmem:[%s243 + $0x1b8] sm:$0xf]
      %v474 = vld [vmem:[%s243 + $0x1bc] sm:$0xff]
      %v475 = vld [vmem:[%s243 + $0x1c4] sm:$0xf]
      %v476 = vld [vmem:[%s243 + $0x1c8] sm:$0xff]
      %v477 = vld [vmem:[%s243 + $0x1d0] sm:$0xf]
      %v478 = vld [vmem:[%s243 + $0x1d4] sm:$0xff]
      %v479 = vld [vmem:[%s243 + $0x1dc] sm:$0xf]
      %v480 = vld [vmem:[%s243 + $0x1e0] sm:$0xff]
      %v481 = vld [vmem:[%s243 + $0x1e8] sm:$0xf]
      %v482 = vld [vmem:[%s243 + $0x1ec] sm:$0xff]
      %v483 = vld [vmem:[%s243 + $0x1f4] sm:$0xf]
      %v484 = vld [vmem:[%s243 + $0x1f8] sm:$0xff]
      %v485 = vld [vmem:[%s243 + $0x200] sm:$0xf]
      %v486 = vld [vmem:[%s243 + $0x204] sm:$0xff]
      %v487 = vld [vmem:[%s243 + $0x20c] sm:$0xf]
      %v488 = vld [vmem:[%s243 + $0x210] sm:$0xff]
      %v489 = vld [vmem:[%s243 + $0x218] sm:$0xf]
      %v490 = vld [vmem:[%s243 + $0x21c] sm:$0xff]
      %v491 = vld [vmem:[%s243 + $0x224] sm:$0xf]
      %v492 = vld [vmem:[%s243 + $0x228] sm:$0xff]
      %v493 = vld [vmem:[%s243 + $0x230] sm:$0xf]
      %v494 = vld [vmem:[%s243 + $0x234] sm:$0xff]
      %v495 = vld [vmem:[%s243 + $0x23c] sm:$0xf]
      %v496 = vld [vmem:[%s243 + $0x240] sm:$0xff]
      %v497 = vld [vmem:[%s243 + $0x248] sm:$0xf]
      %v498 = vld [vmem:[%s243 + $0x24c] sm:$0xff]
      %v499 = vld [vmem:[%s243 + $0x254] sm:$0xf]
      %v500 = vld [vmem:[%s243 + $0x258] sm:$0xff]
      %v501 = vld [vmem:[%s243 + $0x260] sm:$0xf]
      %v502 = vld [vmem:[%s243 + $0x264] sm:$0xff]
      %v503 = vld [vmem:[%s243 + $0x26c] sm:$0xf]
      %v504 = vld [vmem:[%s243 + $0x270] sm:$0xff]
      %v505 = vld [vmem:[%s243 + $0x278] sm:$0xf]
      %v506 = vld [vmem:[%s243 + $0x27c] sm:$0xff]
      %v507 = vld [vmem:[%s243 + $0x284] sm:$0xf]
      %v508 = vld [vmem:[%s243 + $0x288] sm:$0xff]
      %v509 = vld [vmem:[%s243 + $0x290] sm:$0xf]
      %v510 = vld [vmem:[%s243 + $0x294] sm:$0xff]
      %v511 = vld [vmem:[%s243 + $0x29c] sm:$0xf]
      %v512 = vld [vmem:[%s243 + $0x2a0] sm:$0xff]
      %v513 = vld [vmem:[%s243 + $0x2a8] sm:$0xf]
      %v514 = vld [vmem:[%s243 + $0x2ac] sm:$0xff]
      %v515 = vld [vmem:[%s243 + $0x2b4] sm:$0xf]
      %v516 = vld [vmem:[%s243 + $0x2b8] sm:$0xff]
      %v517 = vld [vmem:[%s243 + $0x2c0] sm:$0xf]
      %v518 = vld [vmem:[%s243 + $0x2c4] sm:$0xff]
      %v519 = vld [vmem:[%s243 + $0x2cc] sm:$0xf]
      %v520 = vld [vmem:[%s243 + $0x2d0] sm:$0xff]
      %v521 = vld [vmem:[%s243 + $0x2d8] sm:$0xf]
      %v522 = vld [vmem:[%s243 + $0x2dc] sm:$0xff]
      %v523 = vld [vmem:[%s243 + $0x2e4] sm:$0xf]
      %v524 = vld [vmem:[%s243 + $0x2e8] sm:$0xff]
      %v525 = vld [vmem:[%s243 + $0x2f0] sm:$0xf]
      %v526 = vld [vmem:[%s243 + $0x2f4] sm:$0xff]
      %v527 = vld [vmem:[%s243 + $0x2fc] sm:$0xf]
      %v528 = vld [vmem:[%s253] sm:$0xf]
      %v529 = vld [vmem:[%s253 + $0x4] sm:$0xf]
      %v530 = vld [vmem:[%s253 + $0x8] sm:$0xf]
      %v531 = vld [vmem:[%s253 + $0xc] sm:$0xf]
      %v532 = vld [vmem:[%s253 + $0x10] sm:$0xf]
      %v533 = vld [vmem:[%s253 + $0x14] sm:$0xf]
      %v534 = vld [vmem:[%s253 + $0x18] sm:$0xf]
      %v535 = vld [vmem:[%s253 + $0x1c] sm:$0xf]
      %v536 = vld [vmem:[%s253 + $0x20] sm:$0xf]
      %v537 = vld [vmem:[%s253 + $0x24] sm:$0xf]
      %v538 = vld [vmem:[%s253 + $0x28] sm:$0xf]
      %v539 = vld [vmem:[%s253 + $0x2c] sm:$0xf]
      %v540 = vld [vmem:[%s253 + $0x30] sm:$0xf]
      %v541 = vld [vmem:[%s253 + $0x34] sm:$0xf]
      %v542 = vld [vmem:[%s253 + $0x38] sm:$0xf]
      %v543 = vld [vmem:[%s253 + $0x3c] sm:$0xf]
      %v544 = vld [vmem:[%s253 + $0x40] sm:$0xf]
      %v545 = vld [vmem:[%s253 + $0x44] sm:$0xf]
      %v546 = vld [vmem:[%s253 + $0x48] sm:$0xf]
      %v547 = vld [vmem:[%s253 + $0x4c] sm:$0xf]
      %v548 = vld [vmem:[%s253 + $0x50] sm:$0xf]
      %v549 = vld [vmem:[%s253 + $0x54] sm:$0xf]
      %v550 = vld [vmem:[%s253 + $0x58] sm:$0xf]
      %v551 = vld [vmem:[%s253 + $0x5c] sm:$0xf]
      %v552 = vld [vmem:[%s253 + $0x60] sm:$0xf]
      %v553 = vld [vmem:[%s253 + $0x64] sm:$0xf]
      %v554 = vld [vmem:[%s253 + $0x68] sm:$0xf]
      %v555 = vld [vmem:[%s253 + $0x6c] sm:$0xf]
      %v556 = vld [vmem:[%s253 + $0x70] sm:$0xf]
      %v557 = vld [vmem:[%s253 + $0x74] sm:$0xf]
      %v558 = vld [vmem:[%s253 + $0x78] sm:$0xf]
      %v559 = vld [vmem:[%s253 + $0x7c] sm:$0xf]
      %v560 = vld [vmem:[%s253 + $0x80] sm:$0xf]
      %v561 = vld [vmem:[%s253 + $0x84] sm:$0xf]
      %v562 = vld [vmem:[%s253 + $0x88] sm:$0xf]
      %v563 = vld [vmem:[%s253 + $0x8c] sm:$0xf]
      %v564 = vld [vmem:[%s253 + $0x90] sm:$0xf]
      %v565 = vld [vmem:[%s253 + $0x94] sm:$0xf]
      %v566 = vld [vmem:[%s253 + $0x98] sm:$0xf]
      %v567 = vld [vmem:[%s253 + $0x9c] sm:$0xf]
      %v568 = vld [vmem:[%s253 + $0xa0] sm:$0xf]
      %v569 = vld [vmem:[%s253 + $0xa4] sm:$0xf]
      %v570 = vld [vmem:[%s253 + $0xa8] sm:$0xf]
      %v571 = vld [vmem:[%s253 + $0xac] sm:$0xf]
      %v572 = vld [vmem:[%s253 + $0xb0] sm:$0xf]
      %v573 = vld [vmem:[%s253 + $0xb4] sm:$0xf]
      %v574 = vld [vmem:[%s253 + $0xb8] sm:$0xf]
      %v575 = vld [vmem:[%s253 + $0xbc] sm:$0xf]
      %v704 = vunpack.c.l.b16 %v400
      %v705 = vunpack.c.h.b16 %v400
      %v706 = vunpack.c.l.b16 %v401
      %v707 = vunpack.c.l.b16 %v402
      %v708 = vunpack.c.h.b16 %v402
      %v709 = vunpack.c.l.b16 %v403
      %v710 = vunpack.c.l.b16 %v404
      %v711 = vunpack.c.h.b16 %v404
      %v712 = vunpack.c.l.b16 %v405
      %v713 = vunpack.c.l.b16 %v406
      %v714 = vunpack.c.h.b16 %v406
      %v715 = vunpack.c.l.b16 %v407
      %v716 = vunpack.c.l.b16 %v408
      %v717 = vunpack.c.h.b16 %v408
      %v718 = vunpack.c.l.b16 %v409
      %v719 = vunpack.c.l.b16 %v410
      %v720 = vunpack.c.h.b16 %v410
      %v721 = vunpack.c.l.b16 %v411
      %v722 = vunpack.c.l.b16 %v412
      %v723 = vunpack.c.h.b16 %v412
      %v724 = vunpack.c.l.b16 %v413
      %v725 = vunpack.c.l.b16 %v414
      %v726 = vunpack.c.h.b16 %v414
      %v727 = vunpack.c.l.b16 %v415
      %v728 = vunpack.c.l.b16 %v416
      %v729 = vunpack.c.h.b16 %v416
      %v730 = vunpack.c.l.b16 %v417
      %v731 = vunpack.c.l.b16 %v418
      %v732 = vunpack.c.h.b16 %v418
      %v733 = vunpack.c.l.b16 %v419
      %v734 = vunpack.c.l.b16 %v420
      %v735 = vunpack.c.h.b16 %v420
      %v736 = vunpack.c.l.b16 %v421
      %v737 = vunpack.c.l.b16 %v422
      %v738 = vunpack.c.h.b16 %v422
      %v739 = vunpack.c.l.b16 %v423
      %v740 = vunpack.c.l.b16 %v424
      %v741 = vunpack.c.h.b16 %v424
      %v742 = vunpack.c.l.b16 %v425
      %v743 = vunpack.c.l.b16 %v426
      %v744 = vunpack.c.h.b16 %v426
      %v745 = vunpack.c.l.b16 %v427
      %v746 = vunpack.c.l.b16 %v428
      %v747 = vunpack.c.h.b16 %v428
      %v748 = vunpack.c.l.b16 %v429
      %v749 = vunpack.c.l.b16 %v430
      %v750 = vunpack.c.h.b16 %v430
      %v751 = vunpack.c.l.b16 %v431
      %v752 = vunpack.c.l.b16 %v432
      %v753 = vunpack.c.h.b16 %v432
      %v754 = vunpack.c.l.b16 %v433
      %v755 = vunpack.c.l.b16 %v434
      %v756 = vunpack.c.h.b16 %v434
      %v757 = vunpack.c.l.b16 %v435
      %v758 = vunpack.c.l.b16 %v436
      %v759 = vunpack.c.h.b16 %v436
      %v760 = vunpack.c.l.b16 %v437
      %v761 = vunpack.c.l.b16 %v438
      %v762 = vunpack.c.h.b16 %v438
      %v763 = vunpack.c.l.b16 %v439
      %v764 = vunpack.c.l.b16 %v440
      %v765 = vunpack.c.h.b16 %v440
      %v766 = vunpack.c.l.b16 %v441
      %v767 = vunpack.c.l.b16 %v442
      %v768 = vunpack.c.h.b16 %v442
      %v769 = vunpack.c.l.b16 %v443
      %v770 = vunpack.c.l.b16 %v444
      %v771 = vunpack.c.h.b16 %v444
      %v772 = vunpack.c.l.b16 %v445
      %v773 = vunpack.c.l.b16 %v446
      %v774 = vunpack.c.h.b16 %v446
      %v775 = vunpack.c.l.b16 %v447
      %v776 = vunpack.c.l.b16 %v448
      %v777 = vunpack.c.h.b16 %v448
      %v778 = vunpack.c.l.b16 %v449
      %v779 = vunpack.c.l.b16 %v450
      %v780 = vunpack.c.h.b16 %v450
      %v781 = vunpack.c.l.b16 %v451
      %v782 = vunpack.c.l.b16 %v452
      %v783 = vunpack.c.h.b16 %v452
      %v784 = vunpack.c.l.b16 %v453
      %v785 = vunpack.c.l.b16 %v454
      %v786 = vunpack.c.h.b16 %v454
      %v787 = vunpack.c.l.b16 %v455
      %v788 = vunpack.c.l.b16 %v456
      %v789 = vunpack.c.h.b16 %v456
      %v790 = vunpack.c.l.b16 %v457
      %v791 = vunpack.c.l.b16 %v458
      %v792 = vunpack.c.h.b16 %v458
      %v793 = vunpack.c.l.b16 %v459
      %v794 = vunpack.c.l.b16 %v460
      %v795 = vunpack.c.h.b16 %v460
      %v796 = vunpack.c.l.b16 %v461
      %v797 = vunpack.c.l.b16 %v462
      %v798 = vunpack.c.h.b16 %v462
      %v799 = vunpack.c.l.b16 %v463
      %v800 = vunpack.c.l.b16 %v464
      %v801 = vunpack.c.h.b16 %v464
      %v802 = vunpack.c.l.b16 %v465
      %v803 = vunpack.c.l.b16 %v466
      %v804 = vunpack.c.h.b16 %v466
      %v805 = vunpack.c.l.b16 %v467
      %v806 = vunpack.c.l.b16 %v468
      %v807 = vunpack.c.h.b16 %v468
      %v808 = vunpack.c.l.b16 %v469
      %v809 = vunpack.c.l.b16 %v470
      %v810 = vunpack.c.h.b16 %v470
      %v811 = vunpack.c.l.b16 %v471
      %v812 = vunpack.c.l.b16 %v472
      %v813 = vunpack.c.h.b16 %v472
      %v814 = vunpack.c.l.b16 %v473
      %v815 = vunpack.c.l.b16 %v474
      %v816 = vunpack.c.h.b16 %v474
      %v817 = vunpack.c.l.b16 %v475
      %v818 = vunpack.c.l.b16 %v476
      %v819 = vunpack.c.h.b16 %v476
      %v820 = vunpack.c.l.b16 %v477
      %v821 = vunpack.c.l.b16 %v478
      %v822 = vunpack.c.h.b16 %v478
      %v823 = vunpack.c.l.b16 %v479
      %v824 = vunpack.c.l.b16 %v480
      %v825 = vunpack.c.h.b16 %v480
      %v826 = vunpack.c.l.b16 %v481
      %v827 = vunpack.c.l.b16 %v482
      %v828 = vunpack.c.h.b16 %v482
      %v829 = vunpack.c.l.b16 %v483
      %v830 = vunpack.c.l.b16 %v484
      %v831 = vunpack.c.h.b16 %v484
      %v832 = vunpack.c.l.b16 %v485
      %v833 = vunpack.c.l.b16 %v486
      %v834 = vunpack.c.h.b16 %v486
      %v835 = vunpack.c.l.b16 %v487
      %v836 = vunpack.c.l.b16 %v488
      %v837 = vunpack.c.h.b16 %v488
      %v838 = vunpack.c.l.b16 %v489
      %v839 = vunpack.c.l.b16 %v490
      %v840 = vunpack.c.h.b16 %v490
      %v841 = vunpack.c.l.b16 %v491
      %v842 = vunpack.c.l.b16 %v492
      %v843 = vunpack.c.h.b16 %v492
      %v844 = vunpack.c.l.b16 %v493
      %v845 = vunpack.c.l.b16 %v494
      %v846 = vunpack.c.h.b16 %v494
      %v847 = vunpack.c.l.b16 %v495
      %v848 = vunpack.c.l.b16 %v496
      %v849 = vunpack.c.h.b16 %v496
      %v850 = vunpack.c.l.b16 %v497
      %v851 = vunpack.c.l.b16 %v498
      %v852 = vunpack.c.h.b16 %v498
      %v853 = vunpack.c.l.b16 %v499
      %v854 = vunpack.c.l.b16 %v500
      %v855 = vunpack.c.h.b16 %v500
      %v856 = vunpack.c.l.b16 %v501
      %v857 = vunpack.c.l.b16 %v502
      %v858 = vunpack.c.h.b16 %v502
      %v859 = vunpack.c.l.b16 %v503
      %v860 = vunpack.c.l.b16 %v504
      %v861 = vunpack.c.h.b16 %v504
      %v862 = vunpack.c.l.b16 %v505
      %v863 = vunpack.c.l.b16 %v506
      %v864 = vunpack.c.h.b16 %v506
      %v865 = vunpack.c.l.b16 %v507
      %v866 = vunpack.c.l.b16 %v508
      %v867 = vunpack.c.h.b16 %v508
      %v868 = vunpack.c.l.b16 %v509
      %v869 = vunpack.c.l.b16 %v510
      %v870 = vunpack.c.h.b16 %v510
      %v871 = vunpack.c.l.b16 %v511
      %v872 = vunpack.c.l.b16 %v512
      %v873 = vunpack.c.h.b16 %v512
      %v874 = vunpack.c.l.b16 %v513
      %v875 = vunpack.c.l.b16 %v514
      %v876 = vunpack.c.h.b16 %v514
      %v877 = vunpack.c.l.b16 %v515
      %v878 = vunpack.c.l.b16 %v516
      %v879 = vunpack.c.h.b16 %v516
      %v880 = vunpack.c.l.b16 %v517
      %v881 = vunpack.c.l.b16 %v518
      %v882 = vunpack.c.h.b16 %v518
      %v883 = vunpack.c.l.b16 %v519
      %v884 = vunpack.c.l.b16 %v520
      %v885 = vunpack.c.h.b16 %v520
      %v886 = vunpack.c.l.b16 %v521
      %v887 = vunpack.c.l.b16 %v522
      %v888 = vunpack.c.h.b16 %v522
      %v889 = vunpack.c.l.b16 %v523
      %v890 = vunpack.c.l.b16 %v524
      %v891 = vunpack.c.h.b16 %v524
      %v892 = vunpack.c.l.b16 %v525
      %v893 = vunpack.c.l.b16 %v526
      %v894 = vunpack.c.h.b16 %v526
      %v895 = vunpack.c.l.b16 %v527
      %v896 = vpack.c.b16 %v707, %v704
      %v897 = vpack.c.b16 %v708, %v705
      %v898 = vpack.c.b16 %v709, %v706
      %v899 = vpack.c.b16 %v713, %v710
      %v900 = vpack.c.b16 %v714, %v711
      %v901 = vpack.c.b16 %v715, %v712
      %v902 = vpack.c.b16 %v719, %v716
      %v903 = vpack.c.b16 %v720, %v717
      %v904 = vpack.c.b16 %v721, %v718
      %v905 = vpack.c.b16 %v725, %v722
      %v906 = vpack.c.b16 %v726, %v723
      %v907 = vpack.c.b16 %v727, %v724
      %v908 = vpack.c.b16 %v731, %v728
      %v909 = vpack.c.b16 %v732, %v729
      %v910 = vpack.c.b16 %v733, %v730
      %v911 = vpack.c.b16 %v737, %v734
      %v912 = vpack.c.b16 %v738, %v735
      %v913 = vpack.c.b16 %v739, %v736
      %v914 = vpack.c.b16 %v743, %v740
      %v915 = vpack.c.b16 %v744, %v741
      %v916 = vpack.c.b16 %v745, %v742
      %v917 = vpack.c.b16 %v749, %v746
      %v918 = vpack.c.b16 %v750, %v747
      %v919 = vpack.c.b16 %v751, %v748
      %v920 = vpack.c.b16 %v755, %v752
      %v921 = vpack.c.b16 %v756, %v753
      %v922 = vpack.c.b16 %v757, %v754
      %v923 = vpack.c.b16 %v761, %v758
      %v924 = vpack.c.b16 %v762, %v759
      %v925 = vpack.c.b16 %v763, %v760
      %v926 = vpack.c.b16 %v767, %v764
      %v927 = vpack.c.b16 %v768, %v765
      %v928 = vpack.c.b16 %v769, %v766
      %v929 = vpack.c.b16 %v773, %v770
      %v930 = vpack.c.b16 %v774, %v771
      %v931 = vpack.c.b16 %v775, %v772
      %v932 = vpack.c.b16 %v779, %v776
      %v933 = vpack.c.b16 %v780, %v777
      %v934 = vpack.c.b16 %v781, %v778
      %v935 = vpack.c.b16 %v785, %v782
      %v936 = vpack.c.b16 %v786, %v783
      %v937 = vpack.c.b16 %v787, %v784
      %v938 = vpack.c.b16 %v791, %v788
      %v939 = vpack.c.b16 %v792, %v789
      %v940 = vpack.c.b16 %v793, %v790
      %v941 = vpack.c.b16 %v797, %v794
      %v942 = vpack.c.b16 %v798, %v795
      %v943 = vpack.c.b16 %v799, %v796
      %v944 = vpack.c.b16 %v803, %v800
      %v945 = vpack.c.b16 %v804, %v801
      %v946 = vpack.c.b16 %v805, %v802
      %v947 = vpack.c.b16 %v809, %v806
      %v948 = vpack.c.b16 %v810, %v807
      %v949 = vpack.c.b16 %v811, %v808
      %v950 = vpack.c.b16 %v815, %v812
      %v951 = vpack.c.b16 %v816, %v813
      %v952 = vpack.c.b16 %v817, %v814
      %v953 = vpack.c.b16 %v821, %v818
      %v954 = vpack.c.b16 %v822, %v819
      %v955 = vpack.c.b16 %v823, %v820
      %v956 = vpack.c.b16 %v827, %v824
      %v957 = vpack.c.b16 %v828, %v825
      %v958 = vpack.c.b16 %v829, %v826
      %v959 = vpack.c.b16 %v833, %v830
      %v960 = vpack.c.b16 %v834, %v831
      %v961 = vpack.c.b16 %v835, %v832
      %v962 = vpack.c.b16 %v839, %v836
      %v963 = vpack.c.b16 %v840, %v837
      %v964 = vpack.c.b16 %v841, %v838
      %v965 = vpack.c.b16 %v845, %v842
      %v966 = vpack.c.b16 %v846, %v843
      %v967 = vpack.c.b16 %v847, %v844
      %v968 = vpack.c.b16 %v851, %v848
      %v969 = vpack.c.b16 %v852, %v849
      %v970 = vpack.c.b16 %v853, %v850
      %v971 = vpack.c.b16 %v857, %v854
      %v972 = vpack.c.b16 %v858, %v855
      %v973 = vpack.c.b16 %v859, %v856
      %v974 = vpack.c.b16 %v863, %v860
      %v975 = vpack.c.b16 %v864, %v861
      %v976 = vpack.c.b16 %v865, %v862
      %v977 = vpack.c.b16 %v869, %v866
      %v978 = vpack.c.b16 %v870, %v867
      %v979 = vpack.c.b16 %v871, %v868
      %v980 = vpack.c.b16 %v875, %v872
      %v981 = vpack.c.b16 %v876, %v873
      %v982 = vpack.c.b16 %v877, %v874
      %v983 = vpack.c.b16 %v881, %v878
      %v984 = vpack.c.b16 %v882, %v879
      %v985 = vpack.c.b16 %v883, %v880
      %v986 = vpack.c.b16 %v887, %v884
      %v987 = vpack.c.b16 %v888, %v885
      %v988 = vpack.c.b16 %v889, %v886
      %v989 = vpack.c.b16 %v893, %v890
      %v990 = vpack.c.b16 %v894, %v891
      %v991 = vpack.c.b16 %v895, %v892
      %v1136 = vunpack.c.l.b16 %v528
      %v1137 = vunpack.c.l.b16 %v529
      %v1138 = vunpack.c.l.b16 %v530
      %v1139 = vunpack.c.l.b16 %v531
      %v1140 = vunpack.c.l.b16 %v532
      %v1141 = vunpack.c.l.b16 %v533
      %v1142 = vunpack.c.l.b16 %v534
      %v1143 = vunpack.c.l.b16 %v535
      %v1144 = vunpack.c.l.b16 %v536
      %v1145 = vunpack.c.l.b16 %v537
      %v1146 = vunpack.c.l.b16 %v538
      %v1147 = vunpack.c.l.b16 %v539
      %v1148 = vunpack.c.l.b16 %v540
      %v1149 = vunpack.c.l.b16 %v541
      %v1150 = vunpack.c.l.b16 %v542
      %v1151 = vunpack.c.l.b16 %v543
      %v1152 = vunpack.c.l.b16 %v544
      %v1153 = vunpack.c.l.b16 %v545
      %v1154 = vunpack.c.l.b16 %v546
      %v1155 = vunpack.c.l.b16 %v547
      %v1156 = vunpack.c.l.b16 %v548
      %v1157 = vunpack.c.l.b16 %v549
      %v1158 = vunpack.c.l.b16 %v550
      %v1159 = vunpack.c.l.b16 %v551
      %v1160 = vunpack.c.l.b16 %v552
      %v1161 = vunpack.c.l.b16 %v553
      %v1162 = vunpack.c.l.b16 %v554
      %v1163 = vunpack.c.l.b16 %v555
      %v1164 = vunpack.c.l.b16 %v556
      %v1165 = vunpack.c.l.b16 %v557
      %v1166 = vunpack.c.l.b16 %v558
      %v1167 = vunpack.c.l.b16 %v559
      %v1168 = vunpack.c.l.b16 %v560
      %v1169 = vunpack.c.l.b16 %v561
      %v1170 = vunpack.c.l.b16 %v562
      %v1171 = vunpack.c.l.b16 %v563
      %v1172 = vunpack.c.l.b16 %v564
      %v1173 = vunpack.c.l.b16 %v565
      %v1174 = vunpack.c.l.b16 %v566
      %v1175 = vunpack.c.l.b16 %v567
      %v1176 = vunpack.c.l.b16 %v568
      %v1177 = vunpack.c.l.b16 %v569
      %v1178 = vunpack.c.l.b16 %v570
      %v1179 = vunpack.c.l.b16 %v571
      %v1180 = vunpack.c.l.b16 %v572
      %v1181 = vunpack.c.l.b16 %v573
      %v1182 = vunpack.c.l.b16 %v574
      %v1183 = vunpack.c.l.b16 %v575
      %v1184 = vpack.c.b16 %v1137, %v1136
      %v1185 = vpack.c.b16 %v1139, %v1138
      %v1186 = vpack.c.b16 %v1141, %v1140
      %v1187 = vpack.c.b16 %v1143, %v1142
      %v1188 = vpack.c.b16 %v1145, %v1144
      %v1189 = vpack.c.b16 %v1147, %v1146
      %v1190 = vpack.c.b16 %v1149, %v1148
      %v1191 = vpack.c.b16 %v1151, %v1150
      %v1192 = vpack.c.b16 %v1153, %v1152
      %v1193 = vpack.c.b16 %v1155, %v1154
      %v1194 = vpack.c.b16 %v1157, %v1156
      %v1195 = vpack.c.b16 %v1159, %v1158
      %v1196 = vpack.c.b16 %v1161, %v1160
      %v1197 = vpack.c.b16 %v1163, %v1162
      %v1198 = vpack.c.b16 %v1165, %v1164
      %v1199 = vpack.c.b16 %v1167, %v1166
      %v1200 = vpack.c.b16 %v1169, %v1168
      %v1201 = vpack.c.b16 %v1171, %v1170
      %v1202 = vpack.c.b16 %v1173, %v1172
      %v1203 = vpack.c.b16 %v1175, %v1174
      %v1204 = vpack.c.b16 %v1177, %v1176
      %v1205 = vpack.c.b16 %v1179, %v1178
      %v1206 = vpack.c.b16 %v1181, %v1180
      %v1207 = vpack.c.b16 %v1183, %v1182
      %1232 = vmatprep.subr.bf16.mxu0 0
      %1233 = vmatpush1.bf16.msra.mxu0 %v1184
      %1234 = vmatprep.subr.bf16.mxu0 0
      %1235 = vmatpush1.bf16.msra.mxu0 %v1185
      %1236 = vmatprep.subr.bf16.mxu0 0
      %1237 = vmatpush1.bf16.msra.mxu0 %v1186
      %1238 = vmatprep.subr.bf16.mxu0 0
      %1239 = vmatpush1.bf16.msra.mxu0 %v1187
      %1240 = vmatprep.subr.bf16.mxu0 0
      %1241 = vmatpush1.bf16.msra.mxu0 %v1188
      %1242 = vmatprep.subr.bf16.mxu0 0
      %1243 = vmatpush1.bf16.msra.mxu0 %v1189
      %1244 = vmatprep.subr.bf16.mxu0 0
      %1245 = vmatpush1.bf16.msra.mxu0 %v1190
      %1246 = vmatprep.subr.bf16.mxu0 0
      %1247 = vmatpush1.bf16.msra.mxu0 %v1191
      %1248 = vmatprep.subr.bf16.mxu0 0
      %1249 = vmatpush1.bf16.msra.mxu0 %v1192
      %1250 = vmatprep.subr.bf16.mxu0 0
      %1251 = vmatpush1.bf16.msra.mxu0 %v1193
      %1252 = vmatprep.subr.bf16.mxu0 0
      %1253 = vmatpush1.bf16.msra.mxu0 %v1194
      %1254 = vmatprep.subr.bf16.mxu0 0
      %1255 = vmatpush1.bf16.msra.mxu0 %v1195
      %1256 = vmatprep.subr.bf16.mxu0 0
      %1257 = vmatpush1.bf16.msra.mxu0 %v1196
      %1258 = vmatprep.subr.bf16.mxu0 0
      %1259 = vmatpush1.bf16.msra.mxu0 %v1197
      %1260 = vmatprep.subr.bf16.mxu0 0
      %1261 = vmatpush1.bf16.msra.mxu0 %v1198
      %1262 = vmatprep.subr.bf16.mxu0 0
      %1263 = vmatpush1.bf16.msra.mxu0 %v1199
      %1264 = vmatprep.mubr.bf16.mxu0 %v897
      %1265 = vmatmul.mubr.bf16.gmra.mrb[0].mxu0 %v896
      %v1266 = vpop.f32.mrb[0].mxu0
      %v1267 = vadd.f32 0.0, %v1266
      %v1268 = vpop.f32.mrb[0].mxu0
      %v1269 = vpop.f32.mrb[0].mxu0
      %v1270 = vadd.f32 0.0, %v1269
      %v1271 = vpop.f32.mrb[0].mxu0
      %1272 = vmatprep.mubr.bf16.mxu0 %v900
      %1273 = vmatmul.mubr.bf16.gmra.mrb[0].mxu0 %v899
      %v1274 = vpop.f32.mrb[0].mxu0
      %v1275 = vadd.f32 0.0, %v1274
      %v1276 = vpop.f32.mrb[0].mxu0
      %v1277 = vpop.f32.mrb[0].mxu0
      %v1278 = vadd.f32 0.0, %v1277
      %v1279 = vpop.f32.mrb[0].mxu0
      %1280 = vmatprep.mubr.bf16.mxu0 %v903
      %1281 = vmatmul.mubr.bf16.gmra.mrb[0].mxu0 %v902
      %v1282 = vpop.f32.mrb[0].mxu0
      %v1283 = vadd.f32 0.0, %v1282
      %v1284 = vpop.f32.mrb[0].mxu0
      %v1285 = vpop.f32.mrb[0].mxu0
      %v1286 = vadd.f32 0.0, %v1285
      %v1287 = vpop.f32.mrb[0].mxu0
      %1288 = vmatprep.mubr.bf16.mxu0 %v906
      %1289 = vmatmul.mubr.bf16.gmra.mrb[0].mxu0 %v905
      %v1290 = vpop.f32.mrb[0].mxu0
      %v1291 = vadd.f32 0.0, %v1290
      %v1292 = vpop.f32.mrb[0].mxu0
      %v1293 = vpop.f32.mrb[0].mxu0
      %v1294 = vadd.f32 0.0, %v1293
      %v1295 = vpop.f32.mrb[0].mxu0
      %1296 = vmatprep.mubr.bf16.mxu0 %v909
      %1297 = vmatmul.mubr.bf16.gmra.mrb[0].mxu0 %v908
      %v1298 = vpop.f32.mrb[0].mxu0
      %v1299 = vadd.f32 0.0, %v1298
      %v1300 = vpop.f32.mrb[0].mxu0
      %v1301 = vpop.f32.mrb[0].mxu0
      %v1302 = vadd.f32 0.0, %v1301
      %v1303 = vpop.f32.mrb[0].mxu0
      %1304 = vmatprep.mubr.bf16.mxu0 %v912
      %1305 = vmatmul.mubr.bf16.gmra.mrb[0].mxu0 %v911
      %v1306 = vpop.f32.mrb[0].mxu0
      %v1307 = vadd.f32 0.0, %v1306
      %v1308 = vpop.f32.mrb[0].mxu0
      %v1309 = vpop.f32.mrb[0].mxu0
      %v1310 = vadd.f32 0.0, %v1309
      %v1311 = vpop.f32.mrb[0].mxu0
      %1312 = vmatprep.mubr.bf16.mxu0 %v915
      %1313 = vmatmul.mubr.bf16.gmra.mrb[0].mxu0 %v914
      %v1314 = vpop.f32.mrb[0].mxu0
      %v1315 = vadd.f32 0.0, %v1314
      %v1316 = vpop.f32.mrb[0].mxu0
      %v1317 = vpop.f32.mrb[0].mxu0
      %v1318 = vadd.f32 0.0, %v1317
      %v1319 = vpop.f32.mrb[0].mxu0
      %1320 = vmatprep.mubr.bf16.mxu0 %v918
      %1321 = vmatmul.mubr.bf16.gmra.mrb[0].mxu0 %v917
      %v1322 = vpop.f32.mrb[0].mxu0
      %v1323 = vadd.f32 0.0, %v1322
      %v1324 = vpop.f32.mrb[0].mxu0
      %v1325 = vpop.f32.mrb[0].mxu0
      %v1326 = vadd.f32 0.0, %v1325
      %v1327 = vpop.f32.mrb[0].mxu0
      %1328 = vmatprep.mubr.bf16.mxu0 %v921
      %1329 = vmatmul.mubr.bf16.gmra.mrb[0].mxu0 %v920
      %v1330 = vpop.f32.mrb[0].mxu0
      %v1331 = vadd.f32 0.0, %v1330
      %v1332 = vpop.f32.mrb[0].mxu0
      %v1333 = vpop.f32.mrb[0].mxu0
      %v1334 = vadd.f32 0.0, %v1333
      %v1335 = vpop.f32.mrb[0].mxu0
      %1336 = vmatprep.mubr.bf16.mxu0 %v924
      %1337 = vmatmul.mubr.bf16.gmra.mrb[0].mxu0 %v923
      %v1338 = vpop.f32.mrb[0].mxu0
      %v1339 = vadd.f32 0.0, %v1338
      %v1340 = vpop.f32.mrb[0].mxu0
      %v1341 = vpop.f32.mrb[0].mxu0
      %v1342 = vadd.f32 0.0, %v1341
      %v1343 = vpop.f32.mrb[0].mxu0
      %1344 = vmatprep.mubr.bf16.mxu0 %v927
      %1345 = vmatmul.mubr.bf16.gmra.mrb[0].mxu0 %v926
      %v1346 = vpop.f32.mrb[0].mxu0
      %v1347 = vadd.f32 0.0, %v1346
      %v1348 = vpop.f32.mrb[0].mxu0
      %v1349 = vpop.f32.mrb[0].mxu0
      %v1350 = vadd.f32 0.0, %v1349
      %v1351 = vpop.f32.mrb[0].mxu0
      %1352 = vmatprep.mubr.bf16.mxu0 %v930
      %1353 = vmatmul.mubr.bf16.gmra.mrb[0].mxu0 %v929
      %v1354 = vpop.f32.mrb[0].mxu0
      %v1355 = vadd.f32 0.0, %v1354
      %v1356 = vpop.f32.mrb[0].mxu0
      %v1357 = vpop.f32.mrb[0].mxu0
      %v1358 = vadd.f32 0.0, %v1357
      %v1359 = vpop.f32.mrb[0].mxu0
      %1360 = vmatprep.mubr.bf16.mxu0 %v933
      %1361 = vmatmul.mubr.bf16.gmra.mrb[0].mxu0 %v932
      %v1362 = vpop.f32.mrb[0].mxu0
      %v1363 = vadd.f32 0.0, %v1362
      %v1364 = vpop.f32.mrb[0].mxu0
      %v1365 = vpop.f32.mrb[0].mxu0
      %v1366 = vadd.f32 0.0, %v1365
      %v1367 = vpop.f32.mrb[0].mxu0
      %1368 = vmatprep.mubr.bf16.mxu0 %v936
      %1369 = vmatmul.mubr.bf16.gmra.mrb[0].mxu0 %v935
      %v1370 = vpop.f32.mrb[0].mxu0
      %v1371 = vadd.f32 0.0, %v1370
      %v1372 = vpop.f32.mrb[0].mxu0
      %v1373 = vpop.f32.mrb[0].mxu0
      %v1374 = vadd.f32 0.0, %v1373
      %v1375 = vpop.f32.mrb[0].mxu0
      %1376 = vmatprep.mubr.bf16.mxu0 %v939
      %1377 = vmatmul.mubr.bf16.gmra.mrb[0].mxu0 %v938
      %v1378 = vpop.f32.mrb[0].mxu0
      %v1379 = vadd.f32 0.0, %v1378
      %v1380 = vpop.f32.mrb[0].mxu0
      %v1381 = vpop.f32.mrb[0].mxu0
      %v1382 = vadd.f32 0.0, %v1381
      %v1383 = vpop.f32.mrb[0].mxu0
      %1384 = vmatprep.mubr.bf16.mxu0 %v942
      %1385 = vmatmul.mubr.bf16.gmra.mrb[0].mxu0 %v941
      %v1386 = vpop.f32.mrb[0].mxu0
      %v1387 = vadd.f32 0.0, %v1386
      %v1388 = vpop.f32.mrb[0].mxu0
      %v1389 = vpop.f32.mrb[0].mxu0
      %v1390 = vadd.f32 0.0, %v1389
      %v1391 = vpop.f32.mrb[0].mxu0
      %1392 = vmatprep.mubr.bf16.mxu0 %v945
      %1393 = vmatmul.mubr.bf16.gmra.mrb[0].mxu0 %v944
      %v1394 = vpop.f32.mrb[0].mxu0
      %v1395 = vadd.f32 0.0, %v1394
      %v1396 = vpop.f32.mrb[0].mxu0
      %v1397 = vpop.f32.mrb[0].mxu0
      %v1398 = vadd.f32 0.0, %v1397
      %v1399 = vpop.f32.mrb[0].mxu0
      %1400 = vmatprep.mubr.bf16.mxu0 %v948
      %1401 = vmatmul.mubr.bf16.gmra.mrb[0].mxu0 %v947
      %v1402 = vpop.f32.mrb[0].mxu0
      %v1403 = vadd.f32 0.0, %v1402
      %v1404 = vpop.f32.mrb[0].mxu0
      %v1405 = vpop.f32.mrb[0].mxu0
      %v1406 = vadd.f32 0.0, %v1405
      %v1407 = vpop.f32.mrb[0].mxu0
      %1408 = vmatprep.mubr.bf16.mxu0 %v951
      %1409 = vmatmul.mubr.bf16.gmra.mrb[0].mxu0 %v950
      %v1410 = vpop.f32.mrb[0].mxu0
      %v1411 = vadd.f32 0.0, %v1410
      %v1412 = vpop.f32.mrb[0].mxu0
      %v1413 = vpop.f32.mrb[0].mxu0
      %v1414 = vadd.f32 0.0, %v1413
      %v1415 = vpop.f32.mrb[0].mxu0
      %1416 = vmatprep.mubr.bf16.mxu0 %v954
      %1417 = vmatmul.mubr.bf16.gmra.mrb[0].mxu0 %v953
      %v1418 = vpop.f32.mrb[0].mxu0
      %v1419 = vadd.f32 0.0, %v1418
      %v1420 = vpop.f32.mrb[0].mxu0
      %v1421 = vpop.f32.mrb[0].mxu0
      %v1422 = vadd.f32 0.0, %v1421
      %v1423 = vpop.f32.mrb[0].mxu0
      %1424 = vmatprep.mubr.bf16.mxu0 %v957
      %1425 = vmatmul.mubr.bf16.gmra.mrb[0].mxu0 %v956
      %v1426 = vpop.f32.mrb[0].mxu0
      %v1427 = vadd.f32 0.0, %v1426
      %v1428 = vpop.f32.mrb[0].mxu0
      %v1429 = vpop.f32.mrb[0].mxu0
      %v1430 = vadd.f32 0.0, %v1429
      %v1431 = vpop.f32.mrb[0].mxu0
      %1432 = vmatprep.mubr.bf16.mxu0 %v960
      %1433 = vmatmul.mubr.bf16.gmra.mrb[0].mxu0 %v959
      %v1434 = vpop.f32.mrb[0].mxu0
      %v1435 = vadd.f32 0.0, %v1434
      %v1436 = vpop.f32.mrb[0].mxu0
      %v1437 = vpop.f32.mrb[0].mxu0
      %v1438 = vadd.f32 0.0, %v1437
      %v1439 = vpop.f32.mrb[0].mxu0
      %1440 = vmatprep.mubr.bf16.mxu0 %v963
      %1441 = vmatmul.mubr.bf16.gmra.mrb[0].mxu0 %v962
      %v1442 = vpop.f32.mrb[0].mxu0
      %v1443 = vadd.f32 0.0, %v1442
      %v1444 = vpop.f32.mrb[0].mxu0
      %v1445 = vpop.f32.mrb[0].mxu0
      %v1446 = vadd.f32 0.0, %v1445
      %v1447 = vpop.f32.mrb[0].mxu0
      %1448 = vmatprep.mubr.bf16.mxu0 %v966
      %1449 = vmatmul.mubr.bf16.gmra.mrb[0].mxu0 %v965
      %v1450 = vpop.f32.mrb[0].mxu0
      %v1451 = vadd.f32 0.0, %v1450
      %v1452 = vpop.f32.mrb[0].mxu0
      %v1453 = vpop.f32.mrb[0].mxu0
      %v1454 = vadd.f32 0.0, %v1453
      %v1455 = vpop.f32.mrb[0].mxu0
      %1456 = vmatprep.mubr.bf16.mxu0 %v969
      %1457 = vmatmul.mubr.bf16.gmra.mrb[0].mxu0 %v968
      %v1458 = vpop.f32.mrb[0].mxu0
      %v1459 = vadd.f32 0.0, %v1458
      %v1460 = vpop.f32.mrb[0].mxu0
      %v1461 = vpop.f32.mrb[0].mxu0
      %v1462 = vadd.f32 0.0, %v1461
      %v1463 = vpop.f32.mrb[0].mxu0
      %1464 = vmatprep.mubr.bf16.mxu0 %v972
      %1465 = vmatmul.mubr.bf16.gmra.mrb[0].mxu0 %v971
      %v1466 = vpop.f32.mrb[0].mxu0
      %v1467 = vadd.f32 0.0, %v1466
      %v1468 = vpop.f32.mrb[0].mxu0
      %v1469 = vpop.f32.mrb[0].mxu0
      %v1470 = vadd.f32 0.0, %v1469
      %v1471 = vpop.f32.mrb[0].mxu0
      %1472 = vmatprep.mubr.bf16.mxu0 %v975
      %1473 = vmatmul.mubr.bf16.gmra.mrb[0].mxu0 %v974
      %v1474 = vpop.f32.mrb[0].mxu0
      %v1475 = vadd.f32 0.0, %v1474
      %v1476 = vpop.f32.mrb[0].mxu0
      %v1477 = vpop.f32.mrb[0].mxu0
      %v1478 = vadd.f32 0.0, %v1477
      %v1479 = vpop.f32.mrb[0].mxu0
      %1480 = vmatprep.mubr.bf16.mxu0 %v978
      %1481 = vmatmul.mubr.bf16.gmra.mrb[0].mxu0 %v977
      %v1482 = vpop.f32.mrb[0].mxu0
      %v1483 = vadd.f32 0.0, %v1482
      %v1484 = vpop.f32.mrb[0].mxu0
      %v1485 = vpop.f32.mrb[0].mxu0
      %v1486 = vadd.f32 0.0, %v1485
      %v1487 = vpop.f32.mrb[0].mxu0
      %1488 = vmatprep.mubr.bf16.mxu0 %v981
      %1489 = vmatmul.mubr.bf16.gmra.mrb[0].mxu0 %v980
      %v1490 = vpop.f32.mrb[0].mxu0
      %v1491 = vadd.f32 0.0, %v1490
      %v1492 = vpop.f32.mrb[0].mxu0
      %v1493 = vpop.f32.mrb[0].mxu0
      %v1494 = vadd.f32 0.0, %v1493
      %v1495 = vpop.f32.mrb[0].mxu0
      %1496 = vmatprep.mubr.bf16.mxu0 %v984
      %1497 = vmatmul.mubr.bf16.gmra.mrb[0].mxu0 %v983
      %v1498 = vpop.f32.mrb[0].mxu0
      %v1499 = vadd.f32 0.0, %v1498
      %v1500 = vpop.f32.mrb[0].mxu0
      %v1501 = vpop.f32.mrb[0].mxu0
      %v1502 = vadd.f32 0.0, %v1501
      %v1503 = vpop.f32.mrb[0].mxu0
      %1504 = vmatprep.mubr.bf16.mxu0 %v987
      %1505 = vmatmul.mubr.bf16.gmra.mrb[0].mxu0 %v986
      %v1506 = vpop.f32.mrb[0].mxu0
      %v1507 = vadd.f32 0.0, %v1506
      %v1508 = vpop.f32.mrb[0].mxu0
      %v1509 = vpop.f32.mrb[0].mxu0
      %v1510 = vadd.f32 0.0, %v1509
      %v1511 = vpop.f32.mrb[0].mxu0
      %1512 = vmatprep.mubr.bf16.mxu0 %v990
      %1513 = vmatmul.mubr.bf16.gmra.mrb[0].mxu0 %v989
      %v1514 = vpop.f32.mrb[0].mxu0
      %v1515 = vadd.f32 0.0, %v1514
      %v1516 = vpop.f32.mrb[0].mxu0
      %v1517 = vpop.f32.mrb[0].mxu0
      %v1518 = vadd.f32 0.0, %v1517
      %v1519 = vpop.f32.mrb[0].mxu0
      %1520 = vdwg.mxu0
      %1521 = vmatprep.subr.bf16.mxu0 0
      %1522 = vmatpush1.bf16.msra.mxu0 %v1200
      %1523 = vmatprep.subr.bf16.mxu0 0
      %1524 = vmatpush1.bf16.msra.mxu0 %v1201
      %1525 = vmatprep.subr.bf16.mxu0 0
      %1526 = vmatpush1.bf16.msra.mxu0 %v1202
      %1527 = vmatprep.subr.bf16.mxu0 0
      %1528 = vmatpush1.bf16.msra.mxu0 %v1203
      %1529 = vmatprep.subr.bf16.mxu0 0
      %1530 = vmatpush1.bf16.msra.mxu0 %v1204
      %1531 = vmatprep.subr.bf16.mxu0 0
      %1532 = vmatpush1.bf16.msra.mxu0 %v1205
      %1533 = vmatprep.subr.bf16.mxu0 0
      %1534 = vmatpush1.bf16.msra.mxu0 %v1206
      %1535 = vmatprep.subr.bf16.mxu0 0
      %1536 = vmatpush1.bf16.msra.mxu0 %v1207
      %1537 = vmatprep.subr.bf16.mxu0 0
      %1538 = vmatpush1.bf16.msra.mxu0 0
      %1539 = vmatprep.subr.bf16.mxu0 0
      %1540 = vmatpush1.bf16.msra.mxu0 0
      %1541 = vmatprep.subr.bf16.mxu0 0
      %1542 = vmatpush1.bf16.msra.mxu0 0
      %1543 = vmatprep.subr.bf16.mxu0 0
      %1544 = vmatpush1.bf16.msra.mxu0 0
      %1545 = vmatprep.subr.bf16.mxu0 0
      %1546 = vmatpush1.bf16.msra.mxu0 0
      %1547 = vmatprep.subr.bf16.mxu0 0
      %1548 = vmatpush1.bf16.msra.mxu0 0
      %1549 = vmatprep.subr.bf16.mxu0 0
      %1550 = vmatpush1.bf16.msra.mxu0 0
      %1551 = vmatprep.subr.bf16.mxu0 0
      %1552 = vmatpush1.bf16.msra.mxu0 0
      %1553 = vmatprep.mubr.bf16.mxu0 0
      %1554 = vmatmul.mubr.bf16.gmra.mrb[0].mxu0 %v898
      %v1555 = vpop.f32.mrb[0].mxu0
      %v1556 = vadd.f32 %v1267, %v1555
      %v1557 = vpop.f32.mrb[0].mxu0
      %v1558 = vpop.f32.mrb[0].mxu0
      %v1559 = vadd.f32 %v1270, %v1558
      %v1560 = vpop.f32.mrb[0].mxu0
      %1561 = vmatprep.mubr.bf16.mxu0 0
      %1562 = vmatmul.mubr.bf16.gmra.mrb[0].mxu0 %v901
      %v1563 = vpop.f32.mrb[0].mxu0
      %v1564 = vadd.f32 %v1275, %v1563
      %v1565 = vpop.f32.mrb[0].mxu0
      %v1566 = vpop.f32.mrb[0].mxu0
      %v1567 = vadd.f32 %v1278, %v1566
      %v1568 = vpop.f32.mrb[0].mxu0
      %1569 = vmatprep.mubr.bf16.mxu0 0
      %1570 = vmatmul.mubr.bf16.gmra.mrb[0].mxu0 %v904
      %v1571 = vpop.f32.mrb[0].mxu0
      %v1572 = vadd.f32 %v1283, %v1571
      %v1573 = vpop.f32.mrb[0].mxu0
      %v1574 = vpop.f32.mrb[0].mxu0
      %v1575 = vadd.f32 %v1286, %v1574
      %v1576 = vpop.f32.mrb[0].mxu0
      %1577 = vmatprep.mubr.bf16.mxu0 0
      %1578 = vmatmul.mubr.bf16.gmra.mrb[0].mxu0 %v907
      %v1579 = vpop.f32.mrb[0].mxu0
      %v1580 = vadd.f32 %v1291, %v1579
      %v1581 = vpop.f32.mrb[0].mxu0
      %v1582 = vpop.f32.mrb[0].mxu0
      %v1583 = vadd.f32 %v1294, %v1582
      %v1584 = vpop.f32.mrb[0].mxu0
      %1585 = vmatprep.mubr.bf16.mxu0 0
      %1586 = vmatmul.mubr.bf16.gmra.mrb[0].mxu0 %v910
      %v1587 = vpop.f32.mrb[0].mxu0
      %v1588 = vadd.f32 %v1299, %v1587
      %v1589 = vpop.f32.mrb[0].mxu0
      %v1590 = vpop.f32.mrb[0].mxu0
      %v1591 = vadd.f32 %v1302, %v1590
      %v1592 = vpop.f32.mrb[0].mxu0
      %1593 = vmatprep.mubr.bf16.mxu0 0
      %1594 = vmatmul.mubr.bf16.gmra.mrb[0].mxu0 %v913
      %v1595 = vpop.f32.mrb[0].mxu0
      %v1596 = vadd.f32 %v1307, %v1595
      %v1597 = vpop.f32.mrb[0].mxu0
      %v1598 = vpop.f32.mrb[0].mxu0
      %v1599 = vadd.f32 %v1310, %v1598
      %v1600 = vpop.f32.mrb[0].mxu0
      %1601 = vmatprep.mubr.bf16.mxu0 0
      %1602 = vmatmul.mubr.bf16.gmra.mrb[0].mxu0 %v916
      %v1603 = vpop.f32.mrb[0].mxu0
      %v1604 = vadd.f32 %v1315, %v1603
      %v1605 = vpop.f32.mrb[0].mxu0
      %v1606 = vpop.f32.mrb[0].mxu0
      %v1607 = vadd.f32 %v1318, %v1606
      %v1608 = vpop.f32.mrb[0].mxu0
      %1609 = vmatprep.mubr.bf16.mxu0 0
      %1610 = vmatmul.mubr.bf16.gmra.mrb[0].mxu0 %v919
      %v1611 = vpop.f32.mrb[0].mxu0
      %v1612 = vadd.f32 %v1323, %v1611
      %v1613 = vpop.f32.mrb[0].mxu0
      %v1614 = vpop.f32.mrb[0].mxu0
      %v1615 = vadd.f32 %v1326, %v1614
      %v1616 = vpop.f32.mrb[0].mxu0
      %1617 = vmatprep.mubr.bf16.mxu0 0
      %1618 = vmatmul.mubr.bf16.gmra.mrb[0].mxu0 %v922
      %v1619 = vpop.f32.mrb[0].mxu0
      %v1620 = vadd.f32 %v1331, %v1619
      %v1621 = vpop.f32.mrb[0].mxu0
      %v1622 = vpop.f32.mrb[0].mxu0
      %v1623 = vadd.f32 %v1334, %v1622
      %v1624 = vpop.f32.mrb[0].mxu0
      %1625 = vmatprep.mubr.bf16.mxu0 0
      %1626 = vmatmul.mubr.bf16.gmra.mrb[0].mxu0 %v925
      %v1627 = vpop.f32.mrb[0].mxu0
      %v1628 = vadd.f32 %v1339, %v1627
      %v1629 = vpop.f32.mrb[0].mxu0
      %v1630 = vpop.f32.mrb[0].mxu0
      %v1631 = vadd.f32 %v1342, %v1630
      %v1632 = vpop.f32.mrb[0].mxu0
      %1633 = vmatprep.mubr.bf16.mxu0 0
      %1634 = vmatmul.mubr.bf16.gmra.mrb[0].mxu0 %v928
      %v1635 = vpop.f32.mrb[0].mxu0
      %v1636 = vadd.f32 %v1347, %v1635
      %v1637 = vpop.f32.mrb[0].mxu0
      %v1638 = vpop.f32.mrb[0].mxu0
      %v1639 = vadd.f32 %v1350, %v1638
      %v1640 = vpop.f32.mrb[0].mxu0
      %1641 = vmatprep.mubr.bf16.mxu0 0
      %1642 = vmatmul.mubr.bf16.gmra.mrb[0].mxu0 %v931
      %v1643 = vpop.f32.mrb[0].mxu0
      %v1644 = vadd.f32 %v1355, %v1643
      %v1645 = vpop.f32.mrb[0].mxu0
      %v1646 = vpop.f32.mrb[0].mxu0
      %v1647 = vadd.f32 %v1358, %v1646
      %v1648 = vpop.f32.mrb[0].mxu0
      %1649 = vmatprep.mubr.bf16.mxu0 0
      %1650 = vmatmul.mubr.bf16.gmra.mrb[0].mxu0 %v934
      %v1651 = vpop.f32.mrb[0].mxu0
      %v1652 = vadd.f32 %v1363, %v1651
      %v1653 = vpop.f32.mrb[0].mxu0
      %v1654 = vpop.f32.mrb[0].mxu0
      %v1655 = vadd.f32 %v1366, %v1654
      %v1656 = vpop.f32.mrb[0].mxu0
      %1657 = vmatprep.mubr.bf16.mxu0 0
      %1658 = vmatmul.mubr.bf16.gmra.mrb[0].mxu0 %v937
      %v1659 = vpop.f32.mrb[0].mxu0
      %v1660 = vadd.f32 %v1371, %v1659
      %v1661 = vpop.f32.mrb[0].mxu0
      %v1662 = vpop.f32.mrb[0].mxu0
      %v1663 = vadd.f32 %v1374, %v1662
      %v1664 = vpop.f32.mrb[0].mxu0
      %1665 = vmatprep.mubr.bf16.mxu0 0
      %1666 = vmatmul.mubr.bf16.gmra.mrb[0].mxu0 %v940
      %v1667 = vpop.f32.mrb[0].mxu0
      %v1668 = vadd.f32 %v1379, %v1667
      %v1669 = vpop.f32.mrb[0].mxu0
      %v1670 = vpop.f32.mrb[0].mxu0
      %v1671 = vadd.f32 %v1382, %v1670
      %v1672 = vpop.f32.mrb[0].mxu0
      %1673 = vmatprep.mubr.bf16.mxu0 0
      %1674 = vmatmul.mubr.bf16.gmra.mrb[0].mxu0 %v943
      %v1675 = vpop.f32.mrb[0].mxu0
      %v1676 = vadd.f32 %v1387, %v1675
      %v1677 = vpop.f32.mrb[0].mxu0
      %v1678 = vpop.f32.mrb[0].mxu0
      %v1679 = vadd.f32 %v1390, %v1678
      %v1680 = vpop.f32.mrb[0].mxu0
      %1681 = vmatprep.mubr.bf16.mxu0 0
      %1682 = vmatmul.mubr.bf16.gmra.mrb[0].mxu0 %v946
      %v1683 = vpop.f32.mrb[0].mxu0
      %v1684 = vadd.f32 %v1395, %v1683
      %v1685 = vpop.f32.mrb[0].mxu0
      %v1686 = vpop.f32.mrb[0].mxu0
      %v1687 = vadd.f32 %v1398, %v1686
      %v1688 = vpop.f32.mrb[0].mxu0
      %1689 = vmatprep.mubr.bf16.mxu0 0
      %1690 = vmatmul.mubr.bf16.gmra.mrb[0].mxu0 %v949
      %v1691 = vpop.f32.mrb[0].mxu0
      %v1692 = vadd.f32 %v1403, %v1691
      %v1693 = vpop.f32.mrb[0].mxu0
      %v1694 = vpop.f32.mrb[0].mxu0
      %v1695 = vadd.f32 %v1406, %v1694
      %v1696 = vpop.f32.mrb[0].mxu0
      %1697 = vmatprep.mubr.bf16.mxu0 0
      %1698 = vmatmul.mubr.bf16.gmra.mrb[0].mxu0 %v952
      %v1699 = vpop.f32.mrb[0].mxu0
      %v1700 = vadd.f32 %v1411, %v1699
      %v1701 = vpop.f32.mrb[0].mxu0
      %v1702 = vpop.f32.mrb[0].mxu0
      %v1703 = vadd.f32 %v1414, %v1702
      %v1704 = vpop.f32.mrb[0].mxu0
      %1705 = vmatprep.mubr.bf16.mxu0 0
      %1706 = vmatmul.mubr.bf16.gmra.mrb[0].mxu0 %v955
      %v1707 = vpop.f32.mrb[0].mxu0
      %v1708 = vadd.f32 %v1419, %v1707
      %v1709 = vpop.f32.mrb[0].mxu0
      %v1710 = vpop.f32.mrb[0].mxu0
      %v1711 = vadd.f32 %v1422, %v1710
      %v1712 = vpop.f32.mrb[0].mxu0
      %1713 = vmatprep.mubr.bf16.mxu0 0
      %1714 = vmatmul.mubr.bf16.gmra.mrb[0].mxu0 %v958
      %v1715 = vpop.f32.mrb[0].mxu0
      %v1716 = vadd.f32 %v1427, %v1715
      %v1717 = vpop.f32.mrb[0].mxu0
      %v1718 = vpop.f32.mrb[0].mxu0
      %v1719 = vadd.f32 %v1430, %v1718
      %v1720 = vpop.f32.mrb[0].mxu0
      %1721 = vmatprep.mubr.bf16.mxu0 0
      %1722 = vmatmul.mubr.bf16.gmra.mrb[0].mxu0 %v961
      %v1723 = vpop.f32.mrb[0].mxu0
      %v1724 = vadd.f32 %v1435, %v1723
      %v1725 = vpop.f32.mrb[0].mxu0
      %v1726 = vpop.f32.mrb[0].mxu0
      %v1727 = vadd.f32 %v1438, %v1726
      %v1728 = vpop.f32.mrb[0].mxu0
      %1729 = vmatprep.mubr.bf16.mxu0 0
      %1730 = vmatmul.mubr.bf16.gmra.mrb[0].mxu0 %v964
      %v1731 = vpop.f32.mrb[0].mxu0
      %v1732 = vadd.f32 %v1443, %v1731
      %v1733 = vpop.f32.mrb[0].mxu0
      %v1734 = vpop.f32.mrb[0].mxu0
      %v1735 = vadd.f32 %v1446, %v1734
      %v1736 = vpop.f32.mrb[0].mxu0
      %1737 = vmatprep.mubr.bf16.mxu0 0
      %1738 = vmatmul.mubr.bf16.gmra.mrb[0].mxu0 %v967
      %v1739 = vpop.f32.mrb[0].mxu0
      %v1740 = vadd.f32 %v1451, %v1739
      %v1741 = vpop.f32.mrb[0].mxu0
      %v1742 = vpop.f32.mrb[0].mxu0
      %v1743 = vadd.f32 %v1454, %v1742
      %v1744 = vpop.f32.mrb[0].mxu0
      %1745 = vmatprep.mubr.bf16.mxu0 0
      %1746 = vmatmul.mubr.bf16.gmra.mrb[0].mxu0 %v970
      %v1747 = vpop.f32.mrb[0].mxu0
      %v1748 = vadd.f32 %v1459, %v1747
      %v1749 = vpop.f32.mrb[0].mxu0
      %v1750 = vpop.f32.mrb[0].mxu0
      %v1751 = vadd.f32 %v1462, %v1750
      %v1752 = vpop.f32.mrb[0].mxu0
      %1753 = vmatprep.mubr.bf16.mxu0 0
      %1754 = vmatmul.mubr.bf16.gmra.mrb[0].mxu0 %v973
      %v1755 = vpop.f32.mrb[0].mxu0
      %v1756 = vadd.f32 %v1467, %v1755
      %v1757 = vpop.f32.mrb[0].mxu0
      %v1758 = vpop.f32.mrb[0].mxu0
      %v1759 = vadd.f32 %v1470, %v1758
      %v1760 = vpop.f32.mrb[0].mxu0
      %1761 = vmatprep.mubr.bf16.mxu0 0
      %1762 = vmatmul.mubr.bf16.gmra.mrb[0].mxu0 %v976
      %v1763 = vpop.f32.mrb[0].mxu0
      %v1764 = vadd.f32 %v1475, %v1763
      %v1765 = vpop.f32.mrb[0].mxu0
      %v1766 = vpop.f32.mrb[0].mxu0
      %v1767 = vadd.f32 %v1478, %v1766
      %v1768 = vpop.f32.mrb[0].mxu0
      %1769 = vmatprep.mubr.bf16.mxu0 0
      %1770 = vmatmul.mubr.bf16.gmra.mrb[0].mxu0 %v979
      %v1771 = vpop.f32.mrb[0].mxu0
      %v1772 = vadd.f32 %v1483, %v1771
      %v1773 = vpop.f32.mrb[0].mxu0
      %v1774 = vpop.f32.mrb[0].mxu0
      %v1775 = vadd.f32 %v1486, %v1774
      %v1776 = vpop.f32.mrb[0].mxu0
      %1777 = vmatprep.mubr.bf16.mxu0 0
      %1778 = vmatmul.mubr.bf16.gmra.mrb[0].mxu0 %v982
      %v1779 = vpop.f32.mrb[0].mxu0
      %v1780 = vadd.f32 %v1491, %v1779
      %v1781 = vpop.f32.mrb[0].mxu0
      %v1782 = vpop.f32.mrb[0].mxu0
      %v1783 = vadd.f32 %v1494, %v1782
      %v1784 = vpop.f32.mrb[0].mxu0
      %1785 = vmatprep.mubr.bf16.mxu0 0
      %1786 = vmatmul.mubr.bf16.gmra.mrb[0].mxu0 %v985
      %v1787 = vpop.f32.mrb[0].mxu0
      %v1788 = vadd.f32 %v1499, %v1787
      %v1789 = vpop.f32.mrb[0].mxu0
      %v1790 = vpop.f32.mrb[0].mxu0
      %v1791 = vadd.f32 %v1502, %v1790
      %v1792 = vpop.f32.mrb[0].mxu0
      %1793 = vmatprep.mubr.bf16.mxu0 0
      %1794 = vmatmul.mubr.bf16.gmra.mrb[0].mxu0 %v988
      %v1795 = vpop.f32.mrb[0].mxu0
      %v1796 = vadd.f32 %v1507, %v1795
      %v1797 = vpop.f32.mrb[0].mxu0
      %v1798 = vpop.f32.mrb[0].mxu0
      %v1799 = vadd.f32 %v1510, %v1798
      %v1800 = vpop.f32.mrb[0].mxu0
      %1801 = vmatprep.mubr.bf16.mxu0 0
      %1802 = vmatmul.mubr.bf16.gmra.mrb[0].mxu0 %v991
      %v1803 = vpop.f32.mrb[0].mxu0
      %v1804 = vadd.f32 %v1515, %v1803
      %v1805 = vpop.f32.mrb[0].mxu0
      %v1806 = vpop.f32.mrb[0].mxu0
      %v1807 = vadd.f32 %v1518, %v1806
      %v1808 = vpop.f32.mrb[0].mxu0
      %1809 = vdwg.mxu0
      %v1810 = vadd.f32 %v336, %v1556
      %v1811 = vadd.f32 %v337, %v1559
      %v1812 = vadd.f32 %v338, %v1564
      %v1813 = vadd.f32 %v339, %v1567
      %v1814 = vadd.f32 %v340, %v1572
      %v1815 = vadd.f32 %v341, %v1575
      %v1816 = vadd.f32 %v342, %v1580
      %v1817 = vadd.f32 %v343, %v1583
      %v1818 = vadd.f32 %v344, %v1588
      %v1819 = vadd.f32 %v345, %v1591
      %v1820 = vadd.f32 %v346, %v1596
      %v1821 = vadd.f32 %v347, %v1599
      %v1822 = vadd.f32 %v348, %v1604
      %v1823 = vadd.f32 %v349, %v1607
      %v1824 = vadd.f32 %v350, %v1612
      %v1825 = vadd.f32 %v351, %v1615
      %v1826 = vadd.f32 %v352, %v1620
      %v1827 = vadd.f32 %v353, %v1623
      %v1828 = vadd.f32 %v354, %v1628
      %v1829 = vadd.f32 %v355, %v1631
      %v1830 = vadd.f32 %v356, %v1636
      %v1831 = vadd.f32 %v357, %v1639
      %v1832 = vadd.f32 %v358, %v1644
      %v1833 = vadd.f32 %v359, %v1647
      %v1834 = vadd.f32 %v360, %v1652
      %v1835 = vadd.f32 %v361, %v1655
      %v1836 = vadd.f32 %v362, %v1660
      %v1837 = vadd.f32 %v363, %v1663
      %v1838 = vadd.f32 %v364, %v1668
      %v1839 = vadd.f32 %v365, %v1671
      %v1840 = vadd.f32 %v366, %v1676
      %v1841 = vadd.f32 %v367, %v1679
      %v1842 = vadd.f32 %v368, %v1684
      %v1843 = vadd.f32 %v369, %v1687
      %v1844 = vadd.f32 %v370, %v1692
      %v1845 = vadd.f32 %v371, %v1695
      %v1846 = vadd.f32 %v372, %v1700
      %v1847 = vadd.f32 %v373, %v1703
      %v1848 = vadd.f32 %v374, %v1708
      %v1849 = vadd.f32 %v375, %v1711
      %v1850 = vadd.f32 %v376, %v1716
      %v1851 = vadd.f32 %v377, %v1719
      %v1852 = vadd.f32 %v378, %v1724
      %v1853 = vadd.f32 %v379, %v1727
      %v1854 = vadd.f32 %v380, %v1732
      %v1855 = vadd.f32 %v381, %v1735
      %v1856 = vadd.f32 %v382, %v1740
      %v1857 = vadd.f32 %v383, %v1743
      %v1858 = vadd.f32 %v384, %v1748
      %v1859 = vadd.f32 %v385, %v1751
      %v1860 = vadd.f32 %v386, %v1756
      %v1861 = vadd.f32 %v387, %v1759
      %v1862 = vadd.f32 %v388, %v1764
      %v1863 = vadd.f32 %v389, %v1767
      %v1864 = vadd.f32 %v390, %v1772
      %v1865 = vadd.f32 %v391, %v1775
      %v1866 = vadd.f32 %v392, %v1780
      %v1867 = vadd.f32 %v393, %v1783
      %v1868 = vadd.f32 %v394, %v1788
      %v1869 = vadd.f32 %v395, %v1791
      %v1870 = vadd.f32 %v396, %v1796
      %v1871 = vadd.f32 %v397, %v1799
      %v1872 = vadd.f32 %v398, %v1804
      %v1873 = vadd.f32 %v399, %v1807
      %1874 = vst [vmem:[%s265] sm:$0xff] %v1810
      %1875 = vst [vmem:[%s265 + $0x8] sm:$0xff] %v1811
      %1876 = vst [vmem:[%s265 + $0x10] sm:$0xff] %v1812
      %1877 = vst [vmem:[%s265 + $0x18] sm:$0xff] %v1813
      %1878 = vst [vmem:[%s265 + $0x20] sm:$0xff] %v1814
      %1879 = vst [vmem:[%s265 + $0x28] sm:$0xff] %v1815
      %1880 = vst [vmem:[%s265 + $0x30] sm:$0xff] %v1816
      %1881 = vst [vmem:[%s265 + $0x38] sm:$0xff] %v1817
      %1882 = vst [vmem:[%s265 + $0x40] sm:$0xff] %v1818
      %1883 = vst [vmem:[%s265 + $0x48] sm:$0xff] %v1819
      %1884 = vst [vmem:[%s265 + $0x50] sm:$0xff] %v1820
      %1885 = vst [vmem:[%s265 + $0x58] sm:$0xff] %v1821
      %1886 = vst [vmem:[%s265 + $0x60] sm:$0xff] %v1822
      %1887 = vst [vmem:[%s265 + $0x68] sm:$0xff] %v1823
      %1888 = vst [vmem:[%s265 + $0x70] sm:$0xff] %v1824
      %1889 = vst [vmem:[%s265 + $0x78] sm:$0xff] %v1825
      %1890 = vst [vmem:[%s265 + $0x80] sm:$0xff] %v1826
      %1891 = vst [vmem:[%s265 + $0x88] sm:$0xff] %v1827
      %1892 = vst [vmem:[%s265 + $0x90] sm:$0xff] %v1828
      %1893 = vst [vmem:[%s265 + $0x98] sm:$0xff] %v1829
      %1894 = vst [vmem:[%s265 + $0xa0] sm:$0xff] %v1830
      %1895 = vst [vmem:[%s265 + $0xa8] sm:$0xff] %v1831
      %1896 = vst [vmem:[%s265 + $0xb0] sm:$0xff] %v1832
      %1897 = vst [vmem:[%s265 + $0xb8] sm:$0xff] %v1833
      %1898 = vst [vmem:[%s265 + $0xc0] sm:$0xff] %v1834
      %1899 = vst [vmem:[%s265 + $0xc8] sm:$0xff] %v1835
      %1900 = vst [vmem:[%s265 + $0xd0] sm:$0xff] %v1836
      %1901 = vst [vmem:[%s265 + $0xd8] sm:$0xff] %v1837
      %1902 = vst [vmem:[%s265 + $0xe0] sm:$0xff] %v1838
      %1903 = vst [vmem:[%s265 + $0xe8] sm:$0xff] %v1839
      %1904 = vst [vmem:[%s265 + $0xf0] sm:$0xff] %v1840
      %1905 = vst [vmem:[%s265 + $0xf8] sm:$0xff] %v1841
      %1906 = vst [vmem:[%s265 + $0x100] sm:$0xff] %v1842
      %1907 = vst [vmem:[%s265 + $0x108] sm:$0xff] %v1843
      %1908 = vst [vmem:[%s265 + $0x110] sm:$0xff] %v1844
      %1909 = vst [vmem:[%s265 + $0x118] sm:$0xff] %v1845
      %1910 = vst [vmem:[%s265 + $0x120] sm:$0xff] %v1846
      %1911 = vst [vmem:[%s265 + $0x128] sm:$0xff] %v1847
      %1912 = vst [vmem:[%s265 + $0x130] sm:$0xff] %v1848
      %1913 = vst [vmem:[%s265 + $0x138] sm:$0xff] %v1849
      %1914 = vst [vmem:[%s265 + $0x140] sm:$0xff] %v1850
      %1915 = vst [vmem:[%s265 + $0x148] sm:$0xff] %v1851
      %1916 = vst [vmem:[%s265 + $0x150] sm:$0xff] %v1852
      %1917 = vst [vmem:[%s265 + $0x158] sm:$0xff] %v1853
      %1918 = vst [vmem:[%s265 + $0x160] sm:$0xff] %v1854
      %1919 = vst [vmem:[%s265 + $0x168] sm:$0xff] %v1855
      %1920 = vst [vmem:[%s265 + $0x170] sm:$0xff] %v1856
      %1921 = vst [vmem:[%s265 + $0x178] sm:$0xff] %v1857
      %1922 = vst [vmem:[%s265 + $0x180] sm:$0xff] %v1858
      %1923 = vst [vmem:[%s265 + $0x188] sm:$0xff] %v1859
      %1924 = vst [vmem:[%s265 + $0x190] sm:$0xff] %v1860
      %1925 = vst [vmem:[%s265 + $0x198] sm:$0xff] %v1861
      %1926 = vst [vmem:[%s265 + $0x1a0] sm:$0xff] %v1862
      %1927 = vst [vmem:[%s265 + $0x1a8] sm:$0xff] %v1863
      %1928 = vst [vmem:[%s265 + $0x1b0] sm:$0xff] %v1864
      %1929 = vst [vmem:[%s265 + $0x1b8] sm:$0xff] %v1865
      %1930 = vst [vmem:[%s265 + $0x1c0] sm:$0xff] %v1866
      %1931 = vst [vmem:[%s265 + $0x1c8] sm:$0xff] %v1867
      %1932 = vst [vmem:[%s265 + $0x1d0] sm:$0xff] %v1868
      %1933 = vst [vmem:[%s265 + $0x1d8] sm:$0xff] %v1869
      %1934 = vst [vmem:[%s265 + $0x1e0] sm:$0xff] %v1870
      %1935 = vst [vmem:[%s265 + $0x1e8] sm:$0xff] %v1871
      %1936 = vst [vmem:[%s265 + $0x1f0] sm:$0xff] %v1872
      %1937 = vst [vmem:[%s265 + $0x1f8] sm:$0xff] %v1873
      // Predicated region
      $region37: #{matmul_bias.1} parent=31 // pred_check
        %p1938 = pneg %p268
      $region38: #{matmul_bias.1} parent=31 // pred_check_branch
        %1940 = sbr.rel (%p1938) target = $region40
      $region39: #{matmul_bias.1} parent=31 // pred_region
        %v1941 = vld [vmem:[%s265] sm:$0xff]
        %v1942 = vld [vmem:[%s265 + $0x8] sm:$0xff]
        %v1943 = vld [vmem:[%s265 + $0x10] sm:$0xff]
        %v1944 = vld [vmem:[%s265 + $0x18] sm:$0xff]
        %v1945 = vld [vmem:[%s265 + $0x20] sm:$0xff]
        %v1946 = vld [vmem:[%s265 + $0x28] sm:$0xff]
        %v1947 = vld [vmem:[%s265 + $0x30] sm:$0xff]
        %v1948 = vld [vmem:[%s265 + $0x38] sm:$0xff]
        %v1949 = vld [vmem:[%s265 + $0x40] sm:$0xff]
        %v1950 = vld [vmem:[%s265 + $0x48] sm:$0xff]
        %v1951 = vld [vmem:[%s265 + $0x50] sm:$0xff]
        %v1952 = vld [vmem:[%s265 + $0x58] sm:$0xff]
        %v1953 = vld [vmem:[%s265 + $0x60] sm:$0xff]
        %v1954 = vld [vmem:[%s265 + $0x68] sm:$0xff]
        %v1955 = vld [vmem:[%s265 + $0x70] sm:$0xff]
        %v1956 = vld [vmem:[%s265 + $0x78] sm:$0xff]
        %v1957 = vld [vmem:[%s265 + $0x80] sm:$0xff]
        %v1958 = vld [vmem:[%s265 + $0x88] sm:$0xff]
        %v1959 = vld [vmem:[%s265 + $0x90] sm:$0xff]
        %v1960 = vld [vmem:[%s265 + $0x98] sm:$0xff]
        %v1961 = vld [vmem:[%s265 + $0xa0] sm:$0xff]
        %v1962 = vld [vmem:[%s265 + $0xa8] sm:$0xff]
        %v1963 = vld [vmem:[%s265 + $0xb0] sm:$0xff]
        %v1964 = vld [vmem:[%s265 + $0xb8] sm:$0xff]
        %v1965 = vld [vmem:[%s265 + $0xc0] sm:$0xff]
        %v1966 = vld [vmem:[%s265 + $0xc8] sm:$0xff]
        %v1967 = vld [vmem:[%s265 + $0xd0] sm:$0xff]
        %v1968 = vld [vmem:[%s265 + $0xd8] sm:$0xff]
        %v1969 = vld [vmem:[%s265 + $0xe0] sm:$0xff]
        %v1970 = vld [vmem:[%s265 + $0xe8] sm:$0xff]
        %v1971 = vld [vmem:[%s265 + $0xf0] sm:$0xff]
        %v1972 = vld [vmem:[%s265 + $0xf8] sm:$0xff]
        %v1973 = vld [vmem:[%s265 + $0x100] sm:$0xff]
        %v1974 = vld [vmem:[%s265 + $0x108] sm:$0xff]
        %v1975 = vld [vmem:[%s265 + $0x110] sm:$0xff]
        %v1976 = vld [vmem:[%s265 + $0x118] sm:$0xff]
        %v1977 = vld [vmem:[%s265 + $0x120] sm:$0xff]
        %v1978 = vld [vmem:[%s265 + $0x128] sm:$0xff]
        %v1979 = vld [vmem:[%s265 + $0x130] sm:$0xff]
        %v1980 = vld [vmem:[%s265 + $0x138] sm:$0xff]
        %v1981 = vld [vmem:[%s265 + $0x140] sm:$0xff]
        %v1982 = vld [vmem:[%s265 + $0x148] sm:$0xff]
        %v1983 = vld [vmem:[%s265 + $0x150] sm:$0xff]
        %v1984 = vld [vmem:[%s265 + $0x158] sm:$0xff]
        %v1985 = vld [vmem:[%s265 + $0x160] sm:$0xff]
        %v1986 = vld [vmem:[%s265 + $0x168] sm:$0xff]
        %v1987 = vld [vmem:[%s265 + $0x170] sm:$0xff]
        %v1988 = vld [vmem:[%s265 + $0x178] sm:$0xff]
        %v1989 = vld [vmem:[%s265 + $0x180] sm:$0xff]
        %v1990 = vld [vmem:[%s265 + $0x188] sm:$0xff]
        %v1991 = vld [vmem:[%s265 + $0x190] sm:$0xff]
        %v1992 = vld [vmem:[%s265 + $0x198] sm:$0xff]
        %v1993 = vld [vmem:[%s265 + $0x1a0] sm:$0xff]
        %v1994 = vld [vmem:[%s265 + $0x1a8] sm:$0xff]
        %v1995 = vld [vmem:[%s265 + $0x1b0] sm:$0xff]
        %v1996 = vld [vmem:[%s265 + $0x1b8] sm:$0xff]
        %v1997 = vld [vmem:[%s265 + $0x1c0] sm:$0xff]
        %v1998 = vld [vmem:[%s265 + $0x1c8] sm:$0xff]
        %v1999 = vld [vmem:[%s265 + $0x1d0] sm:$0xff]
        %v2000 = vld [vmem:[%s265 + $0x1d8] sm:$0xff]
        %v2001 = vld [vmem:[%s265 + $0x1e0] sm:$0xff]
        %v2002 = vld [vmem:[%s265 + $0x1e8] sm:$0xff]
        %v2003 = vld [vmem:[%s265 + $0x1f0] sm:$0xff]
        %v2004 = vld [vmem:[%s265 + $0x1f8] sm:$0xff]
        %v2005 = vld [vmem:[%s257] sm:$0x1]
        %v2007 = vlaneseq
        %v2008 = vshrl.u32 %v2007, 7
        %v2009 = vsub.s32 0, %v2008
        %v2010 = vrot.slane %v2005, %v2009
        %v2012 = vadd.f32 %v1941, %v2010
        %v2013 = vadd.f32 %v1942, %v2010
        %v2014 = vadd.f32 %v1943, %v2010
        %v2015 = vadd.f32 %v1944, %v2010
        %v2016 = vadd.f32 %v1945, %v2010
        %v2017 = vadd.f32 %v1946, %v2010
        %v2018 = vadd.f32 %v1947, %v2010
        %v2019 = vadd.f32 %v1948, %v2010
        %v2020 = vadd.f32 %v1949, %v2010
        %v2021 = vadd.f32 %v1950, %v2010
        %v2022 = vadd.f32 %v1951, %v2010
        %v2023 = vadd.f32 %v1952, %v2010
        %v2024 = vadd.f32 %v1953, %v2010
        %v2025 = vadd.f32 %v1954, %v2010
        %v2026 = vadd.f32 %v1955, %v2010
        %v2027 = vadd.f32 %v1956, %v2010
        %v2028 = vadd.f32 %v1957, %v2010
        %v2029 = vadd.f32 %v1958, %v2010
        %v2030 = vadd.f32 %v1959, %v2010
        %v2031 = vadd.f32 %v1960, %v2010
        %v2032 = vadd.f32 %v1961, %v2010
        %v2033 = vadd.f32 %v1962, %v2010
        %v2034 = vadd.f32 %v1963, %v2010
        %v2035 = vadd.f32 %v1964, %v2010
        %v2036 = vadd.f32 %v1965, %v2010
        %v2037 = vadd.f32 %v1966, %v2010
        %v2038 = vadd.f32 %v1967, %v2010
        %v2039 = vadd.f32 %v1968, %v2010
        %v2040 = vadd.f32 %v1969, %v2010
        %v2041 = vadd.f32 %v1970, %v2010
        %v2042 = vadd.f32 %v1971, %v2010
        %v2043 = vadd.f32 %v1972, %v2010
        %v2044 = vadd.f32 %v1973, %v2010
        %v2045 = vadd.f32 %v1974, %v2010
        %v2046 = vadd.f32 %v1975, %v2010
        %v2047 = vadd.f32 %v1976, %v2010
        %v2048 = vadd.f32 %v1977, %v2010
        %v2049 = vadd.f32 %v1978, %v2010
        %v2050 = vadd.f32 %v1979, %v2010
        %v2051 = vadd.f32 %v1980, %v2010
        %v2052 = vadd.f32 %v1981, %v2010
        %v2053 = vadd.f32 %v1982, %v2010
        %v2054 = vadd.f32 %v1983, %v2010
        %v2055 = vadd.f32 %v1984, %v2010
        %v2056 = vadd.f32 %v1985, %v2010
        %v2057 = vadd.f32 %v1986, %v2010
        %v2058 = vadd.f32 %v1987, %v2010
        %v2059 = vadd.f32 %v1988, %v2010
        %v2060 = vadd.f32 %v1989, %v2010
        %v2061 = vadd.f32 %v1990, %v2010
        %v2062 = vadd.f32 %v1991, %v2010
        %v2063 = vadd.f32 %v1992, %v2010
        %v2064 = vadd.f32 %v1993, %v2010
        %v2065 = vadd.f32 %v1994, %v2010
        %v2066 = vadd.f32 %v1995, %v2010
        %v2067 = vadd.f32 %v1996, %v2010
        %v2068 = vadd.f32 %v1997, %v2010
        %v2069 = vadd.f32 %v1998, %v2010
        %v2070 = vadd.f32 %v1999, %v2010
        %v2071 = vadd.f32 %v2000, %v2010
        %v2072 = vadd.f32 %v2001, %v2010
        %v2073 = vadd.f32 %v2002, %v2010
        %v2074 = vadd.f32 %v2003, %v2010
        %v2075 = vadd.f32 %v2004, %v2010
        %v2076 = vmax.f32 %v2012, 0.0
        %v2077 = vmax.f32 %v2013, 0.0
        %v2078 = vmax.f32 %v2014, 0.0
        %v2079 = vmax.f32 %v2015, 0.0
        %v2080 = vmax.f32 %v2016, 0.0
        %v2081 = vmax.f32 %v2017, 0.0
        %v2082 = vmax.f32 %v2018, 0.0
        %v2083 = vmax.f32 %v2019, 0.0
        %v2084 = vmax.f32 %v2020, 0.0
        %v2085 = vmax.f32 %v2021, 0.0
        %v2086 = vmax.f32 %v2022, 0.0
        %v2087 = vmax.f32 %v2023, 0.0
        %v2088 = vmax.f32 %v2024, 0.0
        %v2089 = vmax.f32 %v2025, 0.0
        %v2090 = vmax.f32 %v2026, 0.0
        %v2091 = vmax.f32 %v2027, 0.0
        %v2092 = vmax.f32 %v2028, 0.0
        %v2093 = vmax.f32 %v2029, 0.0
        %v2094 = vmax.f32 %v2030, 0.0
        %v2095 = vmax.f32 %v2031, 0.0
        %v2096 = vmax.f32 %v2032, 0.0
        %v2097 = vmax.f32 %v2033, 0.0
        %v2098 = vmax.f32 %v2034, 0.0
        %v2099 = vmax.f32 %v2035, 0.0
        %v2100 = vmax.f32 %v2036, 0.0
        %v2101 = vmax.f32 %v2037, 0.0
        %v2102 = vmax.f32 %v2038, 0.0
        %v2103 = vmax.f32 %v2039, 0.0
        %v2104 = vmax.f32 %v2040, 0.0
        %v2105 = vmax.f32 %v2041, 0.0
        %v2106 = vmax.f32 %v2042, 0.0
        %v2107 = vmax.f32 %v2043, 0.0
        %v2108 = vmax.f32 %v2044, 0.0
        %v2109 = vmax.f32 %v2045, 0.0
        %v2110 = vmax.f32 %v2046, 0.0
        %v2111 = vmax.f32 %v2047, 0.0
        %v2112 = vmax.f32 %v2048, 0.0
        %v2113 = vmax.f32 %v2049, 0.0
        %v2114 = vmax.f32 %v2050, 0.0
        %v2115 = vmax.f32 %v2051, 0.0
        %v2116 = vmax.f32 %v2052, 0.0
        %v2117 = vmax.f32 %v2053, 0.0
        %v2118 = vmax.f32 %v2054, 0.0
        %v2119 = vmax.f32 %v2055, 0.0
        %v2120 = vmax.f32 %v2056, 0.0
        %v2121 = vmax.f32 %v2057, 0.0
        %v2122 = vmax.f32 %v2058, 0.0
        %v2123 = vmax.f32 %v2059, 0.0
        %v2124 = vmax.f32 %v2060, 0.0
        %v2125 = vmax.f32 %v2061, 0.0
        %v2126 = vmax.f32 %v2062, 0.0
        %v2127 = vmax.f32 %v2063, 0.0
        %v2128 = vmax.f32 %v2064, 0.0
        %v2129 = vmax.f32 %v2065, 0.0
        %v2130 = vmax.f32 %v2066, 0.0
        %v2131 = vmax.f32 %v2067, 0.0
        %v2132 = vmax.f32 %v2068, 0.0
        %v2133 = vmax.f32 %v2069, 0.0
        %v2134 = vmax.f32 %v2070, 0.0
        %v2135 = vmax.f32 %v2071, 0.0
        %v2136 = vmax.f32 %v2072, 0.0
        %v2137 = vmax.f32 %v2073, 0.0
        %v2138 = vmax.f32 %v2074, 0.0
        %v2139 = vmax.f32 %v2075, 0.0
        %2140 = vst [vmem:[%s265] sm:$0xff] %v2076
        %2141 = vst [vmem:[%s265 + $0x8] sm:$0xff] %v2077
        %2142 = vst [vmem:[%s265 + $0x10] sm:$0xff] %v2078
        %2143 = vst [vmem:[%s265 + $0x18] sm:$0xff] %v2079
        %2144 = vst [vmem:[%s265 + $0x20] sm:$0xff] %v2080
        %2145 = vst [vmem:[%s265 + $0x28] sm:$0xff] %v2081
        %2146 = vst [vmem:[%s265 + $0x30] sm:$0xff] %v2082
        %2147 = vst [vmem:[%s265 + $0x38] sm:$0xff] %v2083
        %2148 = vst [vmem:[%s265 + $0x40] sm:$0xff] %v2084
        %2149 = vst [vmem:[%s265 + $0x48] sm:$0xff] %v2085
        %2150 = vst [vmem:[%s265 + $0x50] sm:$0xff] %v2086
        %2151 = vst [vmem:[%s265 + $0x58] sm:$0xff] %v2087
        %2152 = vst [vmem:[%s265 + $0x60] sm:$0xff] %v2088
        %2153 = vst [vmem:[%s265 + $0x68] sm:$0xff] %v2089
        %2154 = vst [vmem:[%s265 + $0x70] sm:$0xff] %v2090
        %2155 = vst [vmem:[%s265 + $0x78] sm:$0xff] %v2091
        %2156 = vst [vmem:[%s265 + $0x80] sm:$0xff] %v2092
        %2157 = vst [vmem:[%s265 + $0x88] sm:$0xff] %v2093
        %2158 = vst [vmem:[%s265 + $0x90] sm:$0xff] %v2094
        %2159 = vst [vmem:[%s265 + $0x98] sm:$0xff] %v2095
        %2160 = vst [vmem:[%s265 + $0xa0] sm:$0xff] %v2096
        %2161 = vst [vmem:[%s265 + $0xa8] sm:$0xff] %v2097
        %2162 = vst [vmem:[%s265 + $0xb0] sm:$0xff] %v2098
        %2163 = vst [vmem:[%s265 + $0xb8] sm:$0xff] %v2099
        %2164 = vst [vmem:[%s265 + $0xc0] sm:$0xff] %v2100
        %2165 = vst [vmem:[%s265 + $0xc8] sm:$0xff] %v2101
        %2166 = vst [vmem:[%s265 + $0xd0] sm:$0xff] %v2102
        %2167 = vst [vmem:[%s265 + $0xd8] sm:$0xff] %v2103
        %2168 = vst [vmem:[%s265 + $0xe0] sm:$0xff] %v2104
        %2169 = vst [vmem:[%s265 + $0xe8] sm:$0xff] %v2105
        %2170 = vst [vmem:[%s265 + $0xf0] sm:$0xff] %v2106
        %2171 = vst [vmem:[%s265 + $0xf8] sm:$0xff] %v2107
        %2172 = vst [vmem:[%s265 + $0x100] sm:$0xff] %v2108
        %2173 = vst [vmem:[%s265 + $0x108] sm:$0xff] %v2109
        %2174 = vst [vmem:[%s265 + $0x110] sm:$0xff] %v2110
        %2175 = vst [vmem:[%s265 + $0x118] sm:$0xff] %v2111
        %2176 = vst [vmem:[%s265 + $0x120] sm:$0xff] %v2112
        %2177 = vst [vmem:[%s265 + $0x128] sm:$0xff] %v2113
        %2178 = vst [vmem:[%s265 + $0x130] sm:$0xff] %v2114
        %2179 = vst [vmem:[%s265 + $0x138] sm:$0xff] %v2115
        %2180 = vst [vmem:[%s265 + $0x140] sm:$0xff] %v2116
        %2181 = vst [vmem:[%s265 + $0x148] sm:$0xff] %v2117
        %2182 = vst [vmem:[%s265 + $0x150] sm:$0xff] %v2118
        %2183 = vst [vmem:[%s265 + $0x158] sm:$0xff] %v2119
        %2184 = vst [vmem:[%s265 + $0x160] sm:$0xff] %v2120
        %2185 = vst [vmem:[%s265 + $0x168] sm:$0xff] %v2121
        %2186 = vst [vmem:[%s265 + $0x170] sm:$0xff] %v2122
        %2187 = vst [vmem:[%s265 + $0x178] sm:$0xff] %v2123
        %2188 = vst [vmem:[%s265 + $0x180] sm:$0xff] %v2124
        %2189 = vst [vmem:[%s265 + $0x188] sm:$0xff] %v2125
        %2190 = vst [vmem:[%s265 + $0x190] sm:$0xff] %v2126
        %2191 = vst [vmem:[%s265 + $0x198] sm:$0xff] %v2127
        %2192 = vst [vmem:[%s265 + $0x1a0] sm:$0xff] %v2128
        %2193 = vst [vmem:[%s265 + $0x1a8] sm:$0xff] %v2129
        %2194 = vst [vmem:[%s265 + $0x1b0] sm:$0xff] %v2130
        %2195 = vst [vmem:[%s265 + $0x1b8] sm:$0xff] %v2131
        %2196 = vst [vmem:[%s265 + $0x1c0] sm:$0xff] %v2132
        %2197 = vst [vmem:[%s265 + $0x1c8] sm:$0xff] %v2133
        %2198 = vst [vmem:[%s265 + $0x1d0] sm:$0xff] %v2134
        %2199 = vst [vmem:[%s265 + $0x1d8] sm:$0xff] %v2135
        %2200 = vst [vmem:[%s265 + $0x1e0] sm:$0xff] %v2136
        %2201 = vst [vmem:[%s265 + $0x1e8] sm:$0xff] %v2137
        %2202 = vst [vmem:[%s265 + $0x1f0] sm:$0xff] %v2138
        %2203 = vst [vmem:[%s265 + $0x1f8] sm:$0xff] %v2139
      $region40: #{matmul_bias.1} parent=31 // pred_fallthru
        _
      %s2204 = smul.u32 64, %s19
      %p2205 = scmp.lt.s32.totalorder %s2204, 127
      %s2206 = scalar_select %p2205, %s2204, 127
      %p2207 = scmp.lt.s32.totalorder %s20, 0
      %s2208 = scalar_select %p2207, %s20, 0
      %s2209 = sadd.s32 %s2208, %s2206
      %s2210 = smul.addr %s2209, 8
      %s2211 = scalar_lea.vmem %s3, %s2210
      // Predicated region
      $region41: #{matmul_bias.1} parent=31 // pred_check
        %p2212 = pneg %p135
      $region42: #{matmul_bias.1} parent=31 // pred_check_branch
        %2214 = sbr.rel (%p2212) target = $region44
      $region43: #{matmul_bias.1} parent=31 // pred_region
        %s2215 = smul.u32 64, %s19
      $region44: #{matmul_bias.1} parent=31 // pred_fallthru
        _
    $region32: #{matmul_bias.1} parent=5 // pred_fallthru
      _
    %p2216 = scmp.le.s32.totalorder 2, %s9
    // Predicated region
    $region45: #{matmul_bias.1} parent=5 // pred_check
      %p2217 = pneg %p2216
    $region46: #{matmul_bias.1} parent=5 // pred_check_branch
      %2219 = sbr.rel (%p2217) target = $region48
    $region47: #{matmul_bias.1} parent=5 // pred_region
      %s2220 = ssub.s32 %s9, 2
      // Predicated region
      $region49: #{matmul_bias.1} parent=47 // pred_check
        %p2221 = pneg %p141
      $region50: #{matmul_bias.1} parent=47 // pred_check_branch
        %2223 = sbr.rel (%p2221) target = $region52
      $region51: #{matmul_bias.1} parent=47 // pred_region
        %s2224 = smul.u32 64, %s22
        %p2225 = scmp.lt.s32.totalorder %s2224, 127
        %s2226 = scalar_select %p2225, %s2224, 127
        %p2227 = scmp.lt.s32.totalorder %s23, 0
        %s2228 = scalar_select %p2227, %s23, 0
        %s2229 = sadd.s32 %s2228, %s2226
        %s2230 = smul.addr %s2229, 8
        %s2231 = scalar_lea.vmem %s3, %s2230
      $region52: #{matmul_bias.1} parent=47 // pred_fallthru
        _
    $region48: #{matmul_bias.1} parent=5 // pred_fallthru
      _
  $region6: #{matmul_bias.1} parent=0 // loop_footer
    %s13 = sadd.s32 1, %s9
  $region7: #{matmul_bias.1} parent=0 // loop_footer_branch
    %8 = sbr.rel target = $region3
  $region8: #{matmul_bias.1} parent=0 // loop_exit
    _

</llo_original>
